<compile_context>
chip_gen: v7x
topology: tpu7x:2x2x1
jax: 0.10.0
libtpu: 0.0.40
codegen_flags: <defaults>
</compile_context>

<pallas_src>
import jax
import jax.numpy as jnp
from jax import lax
from jax.experimental import pallas as pl
from jax.experimental.pallas import tpu as pltpu

NUM_EMBEDDINGS = 1000  # vocab size fixed by the PyTorch module


def _merged_embbag_kernel(idx_ref, start_ref, end_ref, w_ref, o_ref):
    # idx_ref:   (T, seq_len)           int32  indices for T tables
    # start_ref: (T, num_bags)          int32  bag start positions
    # end_ref:   (T, num_bags)          int32  bag end positions (exclusive)
    # w_ref:     (T, num_dim, vocab_p)         transposed embedding tables
    # o_ref:     (1, num_bags, T*num_dim)      lane-dense output slab
    t_blk, seq_len = idx_ref.shape
    num_bags = start_ref.shape[1]
    num_dim = w_ref.shape[1]
    vocab_p = w_ref.shape[2]

    idx = idx_ref[...][:, :, None]      # (T, S, 1)
    start = start_ref[...][:, :, None]  # (T, B, 1)
    end = end_ref[...][:, :, None]      # (T, B, 1)

    # One-hot of indices along the (padded) vocab lane dim: (T, S, Vp), bf16
    # (0/1 values are exact in bf16; accumulation happens in f32).
    vocab_iota = lax.broadcasted_iota(jnp.int32, (1, 1, vocab_p), 2)
    onehot_idx = (idx == vocab_iota).astype(jnp.bfloat16)

    # Bag membership mask from [start, end) boundaries: (T, B, S), bf16.
    pos_iota = lax.broadcasted_iota(jnp.int32, (1, 1, seq_len), 2)
    bag_mask = ((pos_iota >= start) & (pos_iota < end)).astype(jnp.bfloat16)

    # counts[t, b, v] = #positions in bag b of table t whose index == v.
    counts = jnp.einsum("tbs,tsv->tbv", bag_mask, onehot_idx,
                        preferred_element_type=jnp.float32)  # (T, B, Vp) f32

    # out[b, t, :] = sum_v counts[t, b, v] * W[t, :, v]  (== EmbeddingBag sum),
    # emitted directly in (B, T, D) order so the store is one lane-dense slab.
    out = jnp.einsum("tbv,tdv->btd", counts.astype(w_ref.dtype), w_ref[...],
                     preferred_element_type=jnp.float32)     # (B, T, D) f32

    o_ref[...] = out.reshape(1, num_bags, t_blk * num_dim).astype(o_ref.dtype)


def embedding_bag_list(weights, indices, offsets, *, t_block=None, num_steps=2):
    """Pallas equivalent of MergedEmbeddingBag.forward (mode='sum').

    weights: (ntables, vocab, num_dim)
    indices: (ntables, seq_len) int32
    offsets: (ntables, num_bags) int32, non-decreasing, offsets[:, 0] == 0
    Returns: list of ntables arrays of shape (num_bags, num_dim).
    """
    ntables, vocab, num_dim = weights.shape
    seq_len = indices.shape[1]
    num_bags = offsets.shape[1]

    # Pad vocab to a multiple of 128 (full MXU K tiles / lane-dense one-hot).
    vocab_p = pl.cdiv(vocab, 128) * 128

    # Tables per grid step: enough for a >=128-lane output slab, and at most
    # `num_steps` steps over the real tables (>=2 steps lets v7x's two
    # TensorCores split the "parallel" table axis when ntables is large
    # enough; at tiny ntables a 1-step grid wins on per-step overhead).
    if t_block is None:
        lane_tables = pl.cdiv(128, num_dim)
        t_block = max(lane_tables, pl.cdiv(ntables, num_steps))
    steps = pl.cdiv(ntables, t_block)
    if steps > 1:
        # Non-final second-minor block dims must be sublane (8) aligned.
        t_block = pl.cdiv(t_block, 8) * 8
        steps = pl.cdiv(ntables, t_block)
    nt_p = t_block * steps

    # Bag end positions: end[b] = offsets[b + 1], last bag ends at seq_len.
    ends = jnp.concatenate(
        [offsets[:, 1:], jnp.full((ntables, 1), seq_len, offsets.dtype)],
        axis=1)

    # Transposed, padded weights: (nt_p, num_dim, vocab_p) — minor dim is the
    # 128-aligned vocab axis (lane-dense DMA / VMEM).  Padded tables are zero
    # with empty bags, so their outputs are zero and dropped below.
    w_t = jnp.transpose(weights, (0, 2, 1))
    w_p = jnp.pad(w_t, ((0, nt_p - ntables), (0, 0), (0, vocab_p - vocab)))
    idx_p = jnp.pad(indices.astype(jnp.int32), ((0, nt_p - ntables), (0, 0)))
    start_p = jnp.pad(offsets.astype(jnp.int32), ((0, nt_p - ntables), (0, 0)))
    end_p = jnp.pad(ends.astype(jnp.int32), ((0, nt_p - ntables), (0, 0)))

    # Only raise the scoped VMEM limit when the derived budget needs it
    # (double-buffered weight tile + intermediates + slack).
    itemsize = jnp.dtype(weights.dtype).itemsize
    w_block_bytes = t_block * num_dim * vocab_p * itemsize
    onehot_bytes = t_block * seq_len * vocab_p * 2
    counts_bytes = t_block * num_bags * vocab_p * 4
    vmem_need = 2 * w_block_bytes + onehot_bytes + counts_bytes + (4 << 20)
    cp_kwargs = dict(dimension_semantics=("parallel",))
    if vmem_need > (16 << 20):
        cp_kwargs["vmem_limit_bytes"] = vmem_need

    out = pl.pallas_call(
        _merged_embbag_kernel,
        out_shape=jax.ShapeDtypeStruct((steps, num_bags, t_block * num_dim),
                                       weights.dtype),
        grid=(steps,),
        in_specs=[
            pl.BlockSpec((t_block, seq_len), lambda g: (g, 0)),
            pl.BlockSpec((t_block, num_bags), lambda g: (g, 0)),
            pl.BlockSpec((t_block, num_bags), lambda g: (g, 0)),
            pl.BlockSpec((t_block, num_dim, vocab_p), lambda g: (g, 0, 0)),
        ],
        out_specs=pl.BlockSpec((1, num_bags, t_block * num_dim),
                               lambda g: (g, 0, 0)),
        compiler_params=pltpu.CompilerParams(**cp_kwargs),
    )(idx_p, start_p, end_p, w_p)

    # Slab (steps, B, t_block*D) -> (nt_p, B, D), then drop padded tables.
    out = out.reshape(steps, num_bags, t_block, num_dim)
    out = out.transpose(0, 2, 1, 3).reshape(nt_p, num_bags, num_dim)
    return [out[t] for t in range(ntables)]


def _reference(weights, indices, offsets):
    """Plain-JAX reference matching torch.nn.EmbeddingBag(mode='sum')."""
    ntables, _, num_dim = weights.shape
    seq_len = indices.shape[1]
    num_bags = offsets.shape[1]
    outs = []
    for t in range(ntables):
        rows = weights[t][indices[t]]  # (S, D)
        offs = [int(v) for v in offsets[t]] + [seq_len]
        bags = []
        for b in range(num_bags):
            s, e = offs[b], offs[b + 1]
            if e > s:
                bags.append(rows[s:e].sum(axis=0))
            else:
                bags.append(jnp.zeros((num_dim,), weights.dtype))
        outs.append(jnp.stack(bags))
    return outs


if __name__ == "__main__":
    ntables = 3
    num_dim = 32
    seq_len = 16
    num_bags = 4
    vocab = NUM_EMBEDDINGS

    key = jax.random.PRNGKey(0)
    kw, ki = jax.random.split(key)

    # Deterministic synthetic parameters (mirrors EmbeddingBag weight shape).
    weights = (jax.random.normal(kw, (ntables, vocab, num_dim), jnp.float32)
               * 0.01)

    indices = jax.random.randint(ki, (ntables, seq_len), 0, vocab,
                                 dtype=jnp.int32)
    offsets = jnp.array([[0, 3, 7, 12],
                         [0, 4, 8, 12],
                         [0, 2, 2, 10]], dtype=jnp.int32)  # one empty bag

    outs = embedding_bag_list(weights, indices, offsets)
    outs = [jax.block_until_ready(o) for o in outs]

    refs = _reference(weights, indices, offsets)
    for o, r in zip(outs, refs):
        assert o.shape == (num_bags, num_dim)
        assert jnp.allclose(o, r, atol=1e-5, rtol=1e-5), "mismatch vs reference"

    print("KERNEL_OK")
</pallas_src>

<mosaic_0001>
module attributes {stable_mosaic.version = 11 : i64} {
  func.func @_merged_embbag_kernel(%arg0: i32, %arg1: memref<4x16xi32, #tpu.memory_space<vmem>>, %arg2: memref<4x4xi32, #tpu.memory_space<vmem>>, %arg3: memref<4x4xi32, #tpu.memory_space<vmem>>, %arg4: memref<4x32x1024xf32, #tpu.memory_space<vmem>>, %arg5: memref<1x4x128xf32, #tpu.memory_space<vmem>>) attributes {dimension_semantics = [#tpu.dimension_semantics<parallel>], iteration_bounds = array<i64: 1>, scalar_prefetch = 0 : i64, scratch_operands = 0 : i64, tpu.core_type = #tpu.core_type<tc>, window_params = [{transform_indices = @transform_0, window_bounds = array<i64: 4, 16>}, {transform_indices = @transform_1, window_bounds = array<i64: 4, 4>}, {transform_indices = @transform_2, window_bounds = array<i64: 4, 4>}, {transform_indices = @transform_3, window_bounds = array<i64: 4, 32, 1024>}, {transform_indices = @transform_4, window_bounds = array<i64: 1, 4, 128>}]} {
    %c0 = arith.constant 0 : index
    %c0_0 = arith.constant 0 : index
    %0 = vector.load %arg1[%c0, %c0_0] : memref<4x16xi32, #tpu.memory_space<vmem>>, vector<4x16xi32>
    %1 = vector.shape_cast %0 : vector<4x16xi32> to vector<4x16x1xi32>
    %c0_1 = arith.constant 0 : index
    %c0_2 = arith.constant 0 : index
    %2 = vector.load %arg2[%c0_1, %c0_2] : memref<4x4xi32, #tpu.memory_space<vmem>>, vector<4x4xi32>
    %3 = vector.shape_cast %2 : vector<4x4xi32> to vector<4x4x1xi32>
    %c0_3 = arith.constant 0 : index
    %c0_4 = arith.constant 0 : index
    %4 = vector.load %arg3[%c0_3, %c0_4] : memref<4x4xi32, #tpu.memory_space<vmem>>, vector<4x4xi32>
    %5 = vector.shape_cast %4 : vector<4x4xi32> to vector<4x4x1xi32>
    %6 = tpu.iota {dimensions = array<i32: 2>} : vector<1x1x1024xi32>
    %7 = vector.broadcast %1 : vector<4x16x1xi32> to vector<4x16x1024xi32>
    %8 = vector.broadcast %6 : vector<1x1x1024xi32> to vector<4x16x1024xi32>
    %9 = arith.cmpi eq, %7, %8 : vector<4x16x1024xi32>
    %10 = arith.extui %9 : vector<4x16x1024xi1> to vector<4x16x1024xi32>
    %11 = arith.sitofp %10 : vector<4x16x1024xi32> to vector<4x16x1024xf32>
    %12 = arith.truncf %11 : vector<4x16x1024xf32> to vector<4x16x1024xbf16>
    %13 = tpu.iota {dimensions = array<i32: 2>} : vector<1x1x16xi32>
    %14 = vector.broadcast %13 : vector<1x1x16xi32> to vector<4x4x16xi32>
    %15 = vector.broadcast %3 : vector<4x4x1xi32> to vector<4x4x16xi32>
    %16 = arith.cmpi sge, %14, %15 : vector<4x4x16xi32>
    %17 = vector.broadcast %13 : vector<1x1x16xi32> to vector<4x4x16xi32>
    %18 = vector.broadcast %5 : vector<4x4x1xi32> to vector<4x4x16xi32>
    %19 = arith.cmpi slt, %17, %18 : vector<4x4x16xi32>
    %20 = arith.andi %16, %19 : vector<4x4x16xi1>
    %21 = arith.extui %20 : vector<4x4x16xi1> to vector<4x4x16xi32>
    %22 = arith.sitofp %21 : vector<4x4x16xi32> to vector<4x4x16xf32>
    %23 = arith.truncf %22 : vector<4x4x16xf32> to vector<4x4x16xbf16>
    "tpu.trace_start"() <{level = 10 : i32, message = "tbs,tsv->tbv"}> : () -> ()
    %cst = arith.constant dense<0.000000e+00> : vector<4x4x1024xf32>
    %24 = tpu.matmul %23, %12, %cst {dimension_numbers = #tpu.dot_dimension_numbers<[2], [1], [1], [2], [0, 0, 0, 1, 1, 2], [0], [0]>} : vector<4x4x16xbf16>, vector<4x16x1024xbf16>, vector<4x4x1024xf32> -> vector<4x4x1024xf32>
    "tpu.trace_stop"() : () -> ()
    %c0_5 = arith.constant 0 : index
    %c0_6 = arith.constant 0 : index
    %c0_7 = arith.constant 0 : index
    %25 = vector.load %arg4[%c0_5, %c0_6, %c0_7] : memref<4x32x1024xf32, #tpu.memory_space<vmem>>, vector<4x32x1024xf32>
    "tpu.trace_start"() <{level = 10 : i32, message = "tbv,tdv->btd"}> : () -> ()
    %cst_8 = arith.constant dense<0.000000e+00> : vector<4x32x4xf32>
    %26 = tpu.matmul %25, %24, %cst_8 {dimension_numbers = #tpu.dot_dimension_numbers<[2], [2], [1], [1], [0, 0, 0, 1, 1, 1], [0], [0]>} : vector<4x32x1024xf32>, vector<4x4x1024xf32>, vector<4x32x4xf32> -> vector<4x32x4xf32>
    %27 = tpu.transpose %26, [2, 0, 1] : vector<4x32x4xf32> -> vector<4x4x32xf32>
    "tpu.trace_stop"() : () -> ()
    %28 = vector.shape_cast %27 : vector<4x4x32xf32> to vector<1x4x128xf32>
    %c0_9 = arith.constant 0 : index
    %c0_10 = arith.constant 0 : index
    %c0_11 = arith.constant 0 : index
    %29 = vector.load %arg5[%c0_9, %c0_10, %c0_11] : memref<1x4x128xf32, #tpu.memory_space<vmem>>, vector<1x4x128xf32>
    tpu.vector_store %arg5[%c0_9, %c0_10, %c0_11], %28 {strides = array<i32>} : memref<1x4x128xf32, #tpu.memory_space<vmem>>, vector<1x4x128xf32>,
    return
  }
  func.func @transform_0(%arg0: i32) -> (i32, i32) {
    %c0_i32 = arith.constant 0 : i32
    %c0_i32_0 = arith.constant 0 : i32
    return %arg0, %c0_i32 : i32, i32
  }
  func.func @transform_1(%arg0: i32) -> (i32, i32) {
    %c0_i32 = arith.constant 0 : i32
    %c0_i32_0 = arith.constant 0 : i32
    return %arg0, %c0_i32 : i32, i32
  }
  func.func @transform_2(%arg0: i32) -> (i32, i32) {
    %c0_i32 = arith.constant 0 : i32
    %c0_i32_0 = arith.constant 0 : i32
    return %arg0, %c0_i32 : i32, i32
  }
  func.func @transform_3(%arg0: i32) -> (i32, i32, i32) {
    %c0_i32 = arith.constant 0 : i32
    %c0_i32_0 = arith.constant 0 : i32
    %c0_i32_1 = arith.constant 0 : i32
    return %arg0, %c0_i32, %c0_i32_0 : i32, i32, i32
  }
  func.func @transform_4(%arg0: i32) -> (i32, i32, i32) {
    %c0_i32 = arith.constant 0 : i32
    %c0_i32_0 = arith.constant 0 : i32
    %c0_i32_1 = arith.constant 0 : i32
    return %arg0, %c0_i32, %c0_i32_0 : i32, i32, i32
  }
}

</mosaic_0001>

<llo_original>
// kernel: tpu_custom_call.1
$region0: #{tpu_custom_call.1}
  #allocation0 [shape = 'u32[]', space=smem, size = 0x4, offset = 0x4, fixed_abs, tag = 'smem constant byte address 0x4 - core index']
  #allocation1 [shape = 'u32[144,128]{1,0:T(1,128)}', space=vmem, size = 0x12000, scoped, tag = 'internal scratch']
  %s0 = inlined_call_operand.hbm [shape: s32[4,16], index: 0, kind: input, shape index: {}]
  %s1 = inlined_call_operand.hbm [shape: s32[4,4], index: 1, kind: input, shape index: {}]
  %s2 = inlined_call_operand.vmem [shape: s32[4,4], index: 2, kind: input, shape index: {}]
  %s3 = inlined_call_operand.hbm [shape: f32[4,32,1024], index: 3, kind: input, shape index: {}]
  %s4 = inlined_call_operand.hbm [shape: f32[1,4,128], index: 4, kind: output, shape index: {}]
  %s5 = sld [smem:[#allocation0]]
  $region38: #{tpu_custom_call.1} parent=0
    _
  %s7 = ssub.s32 1, %s5
  %s8 = scalar_select 0, %s7, %s5
  $region1: #{tpu_custom_call.1} parent=0
    #allocation2 [shape = 'u8[2048]{0}', space=vmem, size = 0x800, scoped, tag = 'input window, operand 0, single buffered']
    #allocation3 [shape = 's32[1]{0}', space=sflag, size = 0x4, scoped, tag = 'scoped memory for tpu_custom_call.1']
    #allocation4 [shape = 's32[1]{0}', space=sflag, size = 0x4, scoped, tag = 'scoped memory for tpu_custom_call.1']
    #allocation5 [shape = 'u8[2048]{0}', space=vmem, size = 0x800, scoped, tag = 'input window, operand 1, single buffered']
    #allocation6 [shape = 's32[1]{0}', space=sflag, size = 0x4, scoped, tag = 'scoped memory for tpu_custom_call.1']
    #allocation7 [shape = 'u8[524288]{0}', space=vmem, size = 0x80000, scoped, tag = 'input window, operand 3, single buffered']
    #allocation8 [shape = 'u8[2048]{0}', space=vmem, size = 0x800, scoped, tag = 'output window, operand 0, single buffered']
    %9 = vsyncpa [#allocation3], 0
    %10 = vsyncpa [#allocation6], 0
    %11 = vsyncpa [#allocation4], 0
    // Predicated region
    $region2: #{tpu_custom_call.1} parent=1 // pred_check
      _
    $region3: #{tpu_custom_call.1} parent=1 // pred_check_branch
      %13 = sbr.rel (0) target = $region5
    $region4: #{tpu_custom_call.1} parent=1 // pred_region
      %s15 = ssub.s32 64, 64
      %16 = vsyncadd [#allocation3], %s15
      %s18 = sshll.u32 [#allocation2], 4
      %s19 = int_to_ptr.vmem [resolvable:$true] %s18
      %21 = dma.hbm_to_vmem [thread:$0]  %s0, 64, %s19, [#allocation3]
    $region5: #{tpu_custom_call.1} parent=1 // pred_fallthru
      _
    // Predicated region
    $region6: #{tpu_custom_call.1} parent=1 // pred_check
      _
    $region7: #{tpu_custom_call.1} parent=1 // pred_check_branch
      %23 = sbr.rel (0) target = $region9
    $region8: #{tpu_custom_call.1} parent=1 // pred_region
      %s25 = ssub.s32 64, 64
      %26 = vsyncadd [#allocation6], %s25
      %s28 = sshll.u32 [#allocation5], 4
      %s29 = int_to_ptr.vmem [resolvable:$true] %s28
      %31 = dma.hbm_to_vmem [thread:$0]  %s1, 64, %s29, [#allocation6]
    $region9: #{tpu_custom_call.1} parent=1 // pred_fallthru
      _
    // Predicated region
    $region10: #{tpu_custom_call.1} parent=1 // pred_check
      _
    $region11: #{tpu_custom_call.1} parent=1 // pred_check_branch
      %33 = sbr.rel (0) target = $region13
    $region12: #{tpu_custom_call.1} parent=1 // pred_region
      _
    $region13: #{tpu_custom_call.1} parent=1 // pred_fallthru
      _
    // Predicated region
    $region14: #{tpu_custom_call.1} parent=1 // pred_check
      _
    $region15: #{tpu_custom_call.1} parent=1 // pred_check_branch
      %35 = sbr.rel (0) target = $region17
    $region16: #{tpu_custom_call.1} parent=1 // pred_region
      %s37 = ssub.s32 16384, 16384
      %38 = vsyncadd [#allocation6], %s37
      %s39 = sshll.u32 [#allocation7], 4
      %s40 = int_to_ptr.vmem [resolvable:$true] %s39
      %45 = dma.hbm_to_vmem [thread:$0]  %s3, 16384, %s40, [#allocation6], 1024, 1024, 64
    $region17: #{tpu_custom_call.1} parent=1 // pred_fallthru
      _
    // Predicated region
    $region18: #{tpu_custom_call.1} parent=1 // pred_check
      _
    $region19: #{tpu_custom_call.1} parent=1 // pred_check_branch
      %47 = sbr.rel (0) target = $region21
    $region20: #{tpu_custom_call.1} parent=1 // pred_region
      %48 = dma.done [#allocation3], 64
    $region21: #{tpu_custom_call.1} parent=1 // pred_fallthru
      _
    // Predicated region
    $region22: #{tpu_custom_call.1} parent=1 // pred_check
      _
    $region23: #{tpu_custom_call.1} parent=1 // pred_check_branch
      %50 = sbr.rel (0) target = $region25
    $region24: #{tpu_custom_call.1} parent=1 // pred_region
      %51 = dma.done [#allocation6], 64
    $region25: #{tpu_custom_call.1} parent=1 // pred_fallthru
      _
    // Predicated region
    $region26: #{tpu_custom_call.1} parent=1 // pred_check
      _
    $region27: #{tpu_custom_call.1} parent=1 // pred_check_branch
      %53 = sbr.rel (0) target = $region29
    $region28: #{tpu_custom_call.1} parent=1 // pred_region
      %54 = dma.done [#allocation6], 16384
    $region29: #{tpu_custom_call.1} parent=1 // pred_fallthru
      _
    %v56 = vld [vmem:[#allocation2] sm:$0xf]
    %v57 = vlaneseq
    %v58 = vshrl.u32 %v57, 7
    %v59 = vsub.s32 0, %v58
    %v60 = vrot.slane %v56, %v59
    %62 = vbcast.lane.b32.xlu0 %v60, 256
    %v63 = vpop.permute.xlu0 %62
    %s65 = sor.u32 256, 8
    %66 = vbcast.lane.b32.xlu0 %v60, %s65
    %v67 = vpop.permute.xlu0 %66
    %v68 = vlaneseq
    %v69 = vshrl.u32 %v68, 7
    %v70 = vsub.s32 1, %v69
    %v71 = vrot.slane %v56, %v70
    %73 = vbcast.lane.b32.xlu0 %v71, 256
    %v74 = vpop.permute.xlu0 %73
    %s76 = sor.u32 256, 8
    %77 = vbcast.lane.b32.xlu0 %v71, %s76
    %v78 = vpop.permute.xlu0 %77
    %v79 = vlaneseq
    %v80 = vshrl.u32 %v79, 7
    %v81 = vsub.s32 2, %v80
    %v82 = vrot.slane %v56, %v81
    %84 = vbcast.lane.b32.xlu0 %v82, 256
    %v85 = vpop.permute.xlu0 %84
    %s87 = sor.u32 256, 8
    %88 = vbcast.lane.b32.xlu0 %v82, %s87
    %v89 = vpop.permute.xlu0 %88
    %v90 = vlaneseq
    %v91 = vshrl.u32 %v90, 7
    %v92 = vsub.s32 3, %v91
    %v93 = vrot.slane %v56, %v92
    %95 = vbcast.lane.b32.xlu0 %v93, 256
    %v96 = vpop.permute.xlu0 %95
    %s98 = sor.u32 256, 8
    %99 = vbcast.lane.b32.xlu0 %v93, %s98
    %v100 = vpop.permute.xlu0 %99
    %v101 = vld [vmem:[#allocation5] sm:$0xf]
    %v102 = vlaneseq
    %v103 = vshrl.u32 %v102, 7
    %v104 = vsub.s32 0, %v103
    %v105 = vrot.slane %v101, %v104
    %107 = vbcast.lane.b32.xlu0 %v105, 256
    %v108 = vpop.permute.xlu0 %107
    %v109 = vlaneseq
    %v110 = vshrl.u32 %v109, 7
    %v111 = vsub.s32 1, %v110
    %v112 = vrot.slane %v101, %v111
    %114 = vbcast.lane.b32.xlu0 %v112, 256
    %v115 = vpop.permute.xlu0 %114
    %v116 = vlaneseq
    %v117 = vshrl.u32 %v116, 7
    %v118 = vsub.s32 2, %v117
    %v119 = vrot.slane %v101, %v118
    %121 = vbcast.lane.b32.xlu0 %v119, 256
    %v122 = vpop.permute.xlu0 %121
    %v123 = vlaneseq
    %v124 = vshrl.u32 %v123, 7
    %v125 = vsub.s32 3, %v124
    %v126 = vrot.slane %v101, %v125
    %128 = vbcast.lane.b32.xlu0 %v126, 256
    %v129 = vpop.permute.xlu0 %128
    %v130 = vld [vmem:[%s2] sm:$0xf]
    %v131 = vlaneseq
    %v132 = vshrl.u32 %v131, 7
    %v133 = vsub.s32 0, %v132
    %v134 = vrot.slane %v130, %v133
    %136 = vbcast.lane.b32.xlu0 %v134, 256
    %v137 = vpop.permute.xlu0 %136
    %v138 = vlaneseq
    %v139 = vshrl.u32 %v138, 7
    %v140 = vsub.s32 1, %v139
    %v141 = vrot.slane %v130, %v140
    %143 = vbcast.lane.b32.xlu0 %v141, 256
    %v144 = vpop.permute.xlu0 %143
    %v145 = vlaneseq
    %v146 = vshrl.u32 %v145, 7
    %v147 = vsub.s32 2, %v146
    %v148 = vrot.slane %v130, %v147
    %150 = vbcast.lane.b32.xlu0 %v148, 256
    %v151 = vpop.permute.xlu0 %150
    %v152 = vlaneseq
    %v153 = vshrl.u32 %v152, 7
    %v154 = vsub.s32 3, %v153
    %v155 = vrot.slane %v130, %v154
    %157 = vbcast.lane.b32.xlu0 %v155, 256
    %v158 = vpop.permute.xlu0 %157
    %v159 = vlaneseq
    %v160 = vand.u32 %v159, 127
    %v161 = vadd.s32 %v160, 128
    %v162 = vadd.s32 %v160, 256
    %v163 = vadd.s32 %v160, 384
    %v164 = vadd.s32 %v160, 512
    %v165 = vadd.s32 %v160, 640
    %v166 = vadd.s32 %v160, 768
    %v167 = vadd.s32 %v160, 896
    %vm168 = vcmp.eq.s32.totalorder %v63, %v160
    %vm169 = vcmp.eq.s32.totalorder %v63, %v161
    %vm170 = vcmp.eq.s32.totalorder %v63, %v162
    %vm171 = vcmp.eq.s32.totalorder %v63, %v163
    %vm172 = vcmp.eq.s32.totalorder %v63, %v164
    %vm173 = vcmp.eq.s32.totalorder %v63, %v165
    %vm174 = vcmp.eq.s32.totalorder %v63, %v166
    %vm175 = vcmp.eq.s32.totalorder %v63, %v167
    %vm176 = vcmp.eq.s32.totalorder %v67, %v160
    %vm177 = vcmp.eq.s32.totalorder %v67, %v161
    %vm178 = vcmp.eq.s32.totalorder %v67, %v162
    %vm179 = vcmp.eq.s32.totalorder %v67, %v163
    %vm180 = vcmp.eq.s32.totalorder %v67, %v164
    %vm181 = vcmp.eq.s32.totalorder %v67, %v165
    %vm182 = vcmp.eq.s32.totalorder %v67, %v166
    %vm183 = vcmp.eq.s32.totalorder %v67, %v167
    %vm184 = vcmp.eq.s32.totalorder %v74, %v160
    %vm185 = vcmp.eq.s32.totalorder %v74, %v161
    %vm186 = vcmp.eq.s32.totalorder %v74, %v162
    %vm187 = vcmp.eq.s32.totalorder %v74, %v163
    %vm188 = vcmp.eq.s32.totalorder %v74, %v164
    %vm189 = vcmp.eq.s32.totalorder %v74, %v165
    %vm190 = vcmp.eq.s32.totalorder %v74, %v166
    %vm191 = vcmp.eq.s32.totalorder %v74, %v167
    %vm192 = vcmp.eq.s32.totalorder %v78, %v160
    %vm193 = vcmp.eq.s32.totalorder %v78, %v161
    %vm194 = vcmp.eq.s32.totalorder %v78, %v162
    %vm195 = vcmp.eq.s32.totalorder %v78, %v163
    %vm196 = vcmp.eq.s32.totalorder %v78, %v164
    %vm197 = vcmp.eq.s32.totalorder %v78, %v165
    %vm198 = vcmp.eq.s32.totalorder %v78, %v166
    %vm199 = vcmp.eq.s32.totalorder %v78, %v167
    %vm200 = vcmp.eq.s32.totalorder %v85, %v160
    %vm201 = vcmp.eq.s32.totalorder %v85, %v161
    %vm202 = vcmp.eq.s32.totalorder %v85, %v162
    %vm203 = vcmp.eq.s32.totalorder %v85, %v163
    %vm204 = vcmp.eq.s32.totalorder %v85, %v164
    %vm205 = vcmp.eq.s32.totalorder %v85, %v165
    %vm206 = vcmp.eq.s32.totalorder %v85, %v166
    %vm207 = vcmp.eq.s32.totalorder %v85, %v167
    %vm208 = vcmp.eq.s32.totalorder %v89, %v160
    %vm209 = vcmp.eq.s32.totalorder %v89, %v161
    %vm210 = vcmp.eq.s32.totalorder %v89, %v162
    %vm211 = vcmp.eq.s32.totalorder %v89, %v163
    %vm212 = vcmp.eq.s32.totalorder %v89, %v164
    %vm213 = vcmp.eq.s32.totalorder %v89, %v165
    %vm214 = vcmp.eq.s32.totalorder %v89, %v166
    %vm215 = vcmp.eq.s32.totalorder %v89, %v167
    %vm216 = vcmp.eq.s32.totalorder %v96, %v160
    %vm217 = vcmp.eq.s32.totalorder %v96, %v161
    %vm218 = vcmp.eq.s32.totalorder %v96, %v162
    %vm219 = vcmp.eq.s32.totalorder %v96, %v163
    %vm220 = vcmp.eq.s32.totalorder %v96, %v164
    %vm221 = vcmp.eq.s32.totalorder %v96, %v165
    %vm222 = vcmp.eq.s32.totalorder %v96, %v166
    %vm223 = vcmp.eq.s32.totalorder %v96, %v167
    %vm224 = vcmp.eq.s32.totalorder %v100, %v160
    %vm225 = vcmp.eq.s32.totalorder %v100, %v161
    %vm226 = vcmp.eq.s32.totalorder %v100, %v162
    %vm227 = vcmp.eq.s32.totalorder %v100, %v163
    %vm228 = vcmp.eq.s32.totalorder %v100, %v164
    %vm229 = vcmp.eq.s32.totalorder %v100, %v165
    %vm230 = vcmp.eq.s32.totalorder %v100, %v166
    %vm231 = vcmp.eq.s32.totalorder %v100, %v167
    %v232 = vsel %vm168, 1, 0
    %v233 = vsel %vm169, 1, 0
    %v234 = vsel %vm170, 1, 0
    %v235 = vsel %vm171, 1, 0
    %v236 = vsel %vm172, 1, 0
    %v237 = vsel %vm173, 1, 0
    %v238 = vsel %vm174, 1, 0
    %v239 = vsel %vm175, 1, 0
    %v240 = vsel %vm176, 1, 0
    %v241 = vsel %vm177, 1, 0
    %v242 = vsel %vm178, 1, 0
    %v243 = vsel %vm179, 1, 0
    %v244 = vsel %vm180, 1, 0
    %v245 = vsel %vm181, 1, 0
    %v246 = vsel %vm182, 1, 0
    %v247 = vsel %vm183, 1, 0
    %v248 = vsel %vm184, 1, 0
    %v249 = vsel %vm185, 1, 0
    %v250 = vsel %vm186, 1, 0
    %v251 = vsel %vm187, 1, 0
    %v252 = vsel %vm188, 1, 0
    %v253 = vsel %vm189, 1, 0
    %v254 = vsel %vm190, 1, 0
    %v255 = vsel %vm191, 1, 0
    %v256 = vsel %vm192, 1, 0
    %v257 = vsel %vm193, 1, 0
    %v258 = vsel %vm194, 1, 0
    %v259 = vsel %vm195, 1, 0
    %v260 = vsel %vm196, 1, 0
    %v261 = vsel %vm197, 1, 0
    %v262 = vsel %vm198, 1, 0
    %v263 = vsel %vm199, 1, 0
    %v264 = vsel %vm200, 1, 0
    %v265 = vsel %vm201, 1, 0
    %v266 = vsel %vm202, 1, 0
    %v267 = vsel %vm203, 1, 0
    %v268 = vsel %vm204, 1, 0
    %v269 = vsel %vm205, 1, 0
    %v270 = vsel %vm206, 1, 0
    %v271 = vsel %vm207, 1, 0
    %v272 = vsel %vm208, 1, 0
    %v273 = vsel %vm209, 1, 0
    %v274 = vsel %vm210, 1, 0
    %v275 = vsel %vm211, 1, 0
    %v276 = vsel %vm212, 1, 0
    %v277 = vsel %vm213, 1, 0
    %v278 = vsel %vm214, 1, 0
    %v279 = vsel %vm215, 1, 0
    %v280 = vsel %vm216, 1, 0
    %v281 = vsel %vm217, 1, 0
    %v282 = vsel %vm218, 1, 0
    %v283 = vsel %vm219, 1, 0
    %v284 = vsel %vm220, 1, 0
    %v285 = vsel %vm221, 1, 0
    %v286 = vsel %vm222, 1, 0
    %v287 = vsel %vm223, 1, 0
    %v288 = vsel %vm224, 1, 0
    %v289 = vsel %vm225, 1, 0
    %v290 = vsel %vm226, 1, 0
    %v291 = vsel %vm227, 1, 0
    %v292 = vsel %vm228, 1, 0
    %v293 = vsel %vm229, 1, 0
    %v294 = vsel %vm230, 1, 0
    %v295 = vsel %vm231, 1, 0
    %v296 = vcvt.s32.f32 %v232
    %v297 = vcvt.s32.f32 %v233
    %v298 = vcvt.s32.f32 %v234
    %v299 = vcvt.s32.f32 %v235
    %v300 = vcvt.s32.f32 %v236
    %v301 = vcvt.s32.f32 %v237
    %v302 = vcvt.s32.f32 %v238
    %v303 = vcvt.s32.f32 %v239
    %v304 = vcvt.s32.f32 %v240
    %v305 = vcvt.s32.f32 %v241
    %v306 = vcvt.s32.f32 %v242
    %v307 = vcvt.s32.f32 %v243
    %v308 = vcvt.s32.f32 %v244
    %v309 = vcvt.s32.f32 %v245
    %v310 = vcvt.s32.f32 %v246
    %v311 = vcvt.s32.f32 %v247
    %v312 = vcvt.s32.f32 %v248
    %v313 = vcvt.s32.f32 %v249
    %v314 = vcvt.s32.f32 %v250
    %v315 = vcvt.s32.f32 %v251
    %v316 = vcvt.s32.f32 %v252
    %v317 = vcvt.s32.f32 %v253
    %v318 = vcvt.s32.f32 %v254
    %v319 = vcvt.s32.f32 %v255
    %v320 = vcvt.s32.f32 %v256
    %v321 = vcvt.s32.f32 %v257
    %v322 = vcvt.s32.f32 %v258
    %v323 = vcvt.s32.f32 %v259
    %v324 = vcvt.s32.f32 %v260
    %v325 = vcvt.s32.f32 %v261
    %v326 = vcvt.s32.f32 %v262
    %v327 = vcvt.s32.f32 %v263
    %v328 = vcvt.s32.f32 %v264
    %v329 = vcvt.s32.f32 %v265
    %v330 = vcvt.s32.f32 %v266
    %v331 = vcvt.s32.f32 %v267
    %v332 = vcvt.s32.f32 %v268
    %v333 = vcvt.s32.f32 %v269
    %v334 = vcvt.s32.f32 %v270
    %v335 = vcvt.s32.f32 %v271
    %v336 = vcvt.s32.f32 %v272
    %v337 = vcvt.s32.f32 %v273
    %v338 = vcvt.s32.f32 %v274
    %v339 = vcvt.s32.f32 %v275
    %v340 = vcvt.s32.f32 %v276
    %v341 = vcvt.s32.f32 %v277
    %v342 = vcvt.s32.f32 %v278
    %v343 = vcvt.s32.f32 %v279
    %v344 = vcvt.s32.f32 %v280
    %v345 = vcvt.s32.f32 %v281
    %v346 = vcvt.s32.f32 %v282
    %v347 = vcvt.s32.f32 %v283
    %v348 = vcvt.s32.f32 %v284
    %v349 = vcvt.s32.f32 %v285
    %v350 = vcvt.s32.f32 %v286
    %v351 = vcvt.s32.f32 %v287
    %v352 = vcvt.s32.f32 %v288
    %v353 = vcvt.s32.f32 %v289
    %v354 = vcvt.s32.f32 %v290
    %v355 = vcvt.s32.f32 %v291
    %v356 = vcvt.s32.f32 %v292
    %v357 = vcvt.s32.f32 %v293
    %v358 = vcvt.s32.f32 %v294
    %v359 = vcvt.s32.f32 %v295
    %v360 = vpack.c.bf16 %v304, %v296
    %v361 = vpack.c.bf16 %v305, %v297
    %v362 = vpack.c.bf16 %v306, %v298
    %v363 = vpack.c.bf16 %v307, %v299
    %v364 = vpack.c.bf16 %v308, %v300
    %v365 = vpack.c.bf16 %v309, %v301
    %v366 = vpack.c.bf16 %v310, %v302
    %v367 = vpack.c.bf16 %v311, %v303
    %v368 = vpack.c.bf16 %v320, %v312
    %v369 = vpack.c.bf16 %v321, %v313
    %v370 = vpack.c.bf16 %v322, %v314
    %v371 = vpack.c.bf16 %v323, %v315
    %v372 = vpack.c.bf16 %v324, %v316
    %v373 = vpack.c.bf16 %v325, %v317
    %v374 = vpack.c.bf16 %v326, %v318
    %v375 = vpack.c.bf16 %v327, %v319
    %v376 = vpack.c.bf16 %v336, %v328
    %v377 = vpack.c.bf16 %v337, %v329
    %v378 = vpack.c.bf16 %v338, %v330
    %v379 = vpack.c.bf16 %v339, %v331
    %v380 = vpack.c.bf16 %v340, %v332
    %v381 = vpack.c.bf16 %v341, %v333
    %v382 = vpack.c.bf16 %v342, %v334
    %v383 = vpack.c.bf16 %v343, %v335
    %v384 = vpack.c.bf16 %v352, %v344
    %v385 = vpack.c.bf16 %v353, %v345
    %v386 = vpack.c.bf16 %v354, %v346
    %v387 = vpack.c.bf16 %v355, %v347
    %v388 = vpack.c.bf16 %v356, %v348
    %v389 = vpack.c.bf16 %v357, %v349
    %v390 = vpack.c.bf16 %v358, %v350
    %v391 = vpack.c.bf16 %v359, %v351
    %vm392 = vcmp.ge.s32.totalorder %v160, %v108
    %vm393 = vcmp.ge.s32.totalorder %v160, %v115
    %vm394 = vcmp.ge.s32.totalorder %v160, %v122
    %vm395 = vcmp.ge.s32.totalorder %v160, %v129
    %vm396 = vcmp.lt.s32.totalorder %v160, %v137
    %vm397 = vcmp.lt.s32.totalorder %v160, %v144
    %vm398 = vcmp.lt.s32.totalorder %v160, %v151
    %vm399 = vcmp.lt.s32.totalorder %v160, %v158
    %vm400 = vmand %vm392, %vm396
    %vm401 = vmand %vm393, %vm397
    %vm402 = vmand %vm394, %vm398
    %vm403 = vmand %vm395, %vm399
    %v404 = vsel %vm400, 1, 0
    %v405 = vsel %vm401, 1, 0
    %v406 = vsel %vm402, 1, 0
    %v407 = vsel %vm403, 1, 0
    %v408 = vcvt.s32.f32 %v404
    %v409 = vcvt.s32.f32 %v405
    %v410 = vcvt.s32.f32 %v406
    %v411 = vcvt.s32.f32 %v407
    %v412 = vpack.c.bf16 %v408, %v408
    %v413 = vpack.c.bf16 %v409, %v409
    %v414 = vpack.c.bf16 %v410, %v410
    %v415 = vpack.c.bf16 %v411, %v411
    %vm416 = vcmask 130048
    %v418 = vsel %vm416, %v412, 0
    %420 = vmatprep.subr.bf16.mxu0 %v361
    %421 = vmatpush1.bf16.msra.mxu0 %v360
    %422 = vmatprep.subr.bf16.mxu0 0
    %423 = vmatpush1.bf16.msra.mxu0 0
    %424 = vmatprep.subr.bf16.mxu0 0
    %425 = vmatpush1.bf16.msra.mxu0 0
    %426 = vmatprep.subr.bf16.mxu0 0
    %427 = vmatpush1.bf16.msra.mxu0 0
    %428 = vmatprep.subr.bf16.mxu0 0
    %429 = vmatpush1.bf16.msra.mxu0 0
    %430 = vmatprep.subr.bf16.mxu0 0
    %431 = vmatpush1.bf16.msra.mxu0 0
    %432 = vmatprep.subr.bf16.mxu0 0
    %433 = vmatpush1.bf16.msra.mxu0 0
    %434 = vmatprep.subr.bf16.mxu0 0
    %435 = vmatpush1.bf16.msra.mxu0 0
    %436 = vmatprep.subr.bf16.mxu0 0
    %437 = vmatpush1.bf16.msra.mxu0 0
    %438 = vmatprep.subr.bf16.mxu0 0
    %439 = vmatpush1.bf16.msra.mxu0 0
    %440 = vmatprep.subr.bf16.mxu0 0
    %441 = vmatpush1.bf16.msra.mxu0 0
    %442 = vmatprep.subr.bf16.mxu0 0
    %443 = vmatpush1.bf16.msra.mxu0 0
    %444 = vmatprep.subr.bf16.mxu0 0
    %445 = vmatpush1.bf16.msra.mxu0 0
    %446 = vmatprep.subr.bf16.mxu0 0
    %447 = vmatpush1.bf16.msra.mxu0 0
    %448 = vmatprep.subr.bf16.mxu0 0
    %449 = vmatpush1.bf16.msra.mxu0 0
    %450 = vmatprep.subr.bf16.mxu0 0
    %451 = vmatpush1.bf16.msra.mxu0 0
    %452 = vmatprep.mubr.bf16.mxu0 0
    %453 = vmatmul.mubr.bf16.gmra.mrb[0].mxu0 %v418
    %v454 = vpop.f32.mrb[0].mxu0
    %v455 = vadd.f32 0.0, %v454
    %v456 = vpop.f32.mrb[0].mxu0
    %v457 = vadd.f32 0.0, %v456
    %v458 = vpop.f32.mrb[0].mxu0
    %v459 = vpop.f32.mrb[0].mxu0
    %460 = vdwg.mxu0
    %461 = vmatprep.subr.bf16.mxu0 %v363
    %462 = vmatpush1.bf16.msra.mxu0 %v362
    %463 = vmatprep.subr.bf16.mxu0 0
    %464 = vmatpush1.bf16.msra.mxu0 0
    %465 = vmatprep.subr.bf16.mxu0 0
    %466 = vmatpush1.bf16.msra.mxu0 0
    %467 = vmatprep.subr.bf16.mxu0 0
    %468 = vmatpush1.bf16.msra.mxu0 0
    %469 = vmatprep.subr.bf16.mxu0 0
    %470 = vmatpush1.bf16.msra.mxu0 0
    %471 = vmatprep.subr.bf16.mxu0 0
    %472 = vmatpush1.bf16.msra.mxu0 0
    %473 = vmatprep.subr.bf16.mxu0 0
    %474 = vmatpush1.bf16.msra.mxu0 0
    %475 = vmatprep.subr.bf16.mxu0 0
    %476 = vmatpush1.bf16.msra.mxu0 0
    %477 = vmatprep.subr.bf16.mxu0 0
    %478 = vmatpush1.bf16.msra.mxu0 0
    %479 = vmatprep.subr.bf16.mxu0 0
    %480 = vmatpush1.bf16.msra.mxu0 0
    %481 = vmatprep.subr.bf16.mxu0 0
    %482 = vmatpush1.bf16.msra.mxu0 0
    %483 = vmatprep.subr.bf16.mxu0 0
    %484 = vmatpush1.bf16.msra.mxu0 0
    %485 = vmatprep.subr.bf16.mxu0 0
    %486 = vmatpush1.bf16.msra.mxu0 0
    %487 = vmatprep.subr.bf16.mxu0 0
    %488 = vmatpush1.bf16.msra.mxu0 0
    %489 = vmatprep.subr.bf16.mxu0 0
    %490 = vmatpush1.bf16.msra.mxu0 0
    %491 = vmatprep.subr.bf16.mxu0 0
    %492 = vmatpush1.bf16.msra.mxu0 0
    %493 = vmatprep.mubr.bf16.mxu0 0
    %494 = vmatmul.mubr.bf16.gmra.mrb[0].mxu0 %v418
    %v495 = vpop.f32.mrb[0].mxu0
    %v496 = vadd.f32 0.0, %v495
    %v497 = vpop.f32.mrb[0].mxu0
    %v498 = vadd.f32 0.0, %v497
    %v499 = vpop.f32.mrb[0].mxu0
    %v500 = vpop.f32.mrb[0].mxu0
    %501 = vdwg.mxu0
    %502 = vmatprep.subr.bf16.mxu0 %v365
    %503 = vmatpush1.bf16.msra.mxu0 %v364
    %504 = vmatprep.subr.bf16.mxu0 0
    %505 = vmatpush1.bf16.msra.mxu0 0
    %506 = vmatprep.subr.bf16.mxu0 0
    %507 = vmatpush1.bf16.msra.mxu0 0
    %508 = vmatprep.subr.bf16.mxu0 0
    %509 = vmatpush1.bf16.msra.mxu0 0
    %510 = vmatprep.subr.bf16.mxu0 0
    %511 = vmatpush1.bf16.msra.mxu0 0
    %512 = vmatprep.subr.bf16.mxu0 0
    %513 = vmatpush1.bf16.msra.mxu0 0
    %514 = vmatprep.subr.bf16.mxu0 0
    %515 = vmatpush1.bf16.msra.mxu0 0
    %516 = vmatprep.subr.bf16.mxu0 0
    %517 = vmatpush1.bf16.msra.mxu0 0
    %518 = vmatprep.subr.bf16.mxu0 0
    %519 = vmatpush1.bf16.msra.mxu0 0
    %520 = vmatprep.subr.bf16.mxu0 0
    %521 = vmatpush1.bf16.msra.mxu0 0
    %522 = vmatprep.subr.bf16.mxu0 0
    %523 = vmatpush1.bf16.msra.mxu0 0
    %524 = vmatprep.subr.bf16.mxu0 0
    %525 = vmatpush1.bf16.msra.mxu0 0
    %526 = vmatprep.subr.bf16.mxu0 0
    %527 = vmatpush1.bf16.msra.mxu0 0
    %528 = vmatprep.subr.bf16.mxu0 0
    %529 = vmatpush1.bf16.msra.mxu0 0
    %530 = vmatprep.subr.bf16.mxu0 0
    %531 = vmatpush1.bf16.msra.mxu0 0
    %532 = vmatprep.subr.bf16.mxu0 0
    %533 = vmatpush1.bf16.msra.mxu0 0
    %534 = vmatprep.mubr.bf16.mxu0 0
    %535 = vmatmul.mubr.bf16.gmra.mrb[0].mxu0 %v418
    %v536 = vpop.f32.mrb[0].mxu0
    %v537 = vadd.f32 0.0, %v536
    %v538 = vpop.f32.mrb[0].mxu0
    %v539 = vadd.f32 0.0, %v538
    %v540 = vpop.f32.mrb[0].mxu0
    %v541 = vpop.f32.mrb[0].mxu0
    %542 = vdwg.mxu0
    %543 = vmatprep.subr.bf16.mxu0 %v367
    %544 = vmatpush1.bf16.msra.mxu0 %v366
    %545 = vmatprep.subr.bf16.mxu0 0
    %546 = vmatpush1.bf16.msra.mxu0 0
    %547 = vmatprep.subr.bf16.mxu0 0
    %548 = vmatpush1.bf16.msra.mxu0 0
    %549 = vmatprep.subr.bf16.mxu0 0
    %550 = vmatpush1.bf16.msra.mxu0 0
    %551 = vmatprep.subr.bf16.mxu0 0
    %552 = vmatpush1.bf16.msra.mxu0 0
    %553 = vmatprep.subr.bf16.mxu0 0
    %554 = vmatpush1.bf16.msra.mxu0 0
    %555 = vmatprep.subr.bf16.mxu0 0
    %556 = vmatpush1.bf16.msra.mxu0 0
    %557 = vmatprep.subr.bf16.mxu0 0
    %558 = vmatpush1.bf16.msra.mxu0 0
    %559 = vmatprep.subr.bf16.mxu0 0
    %560 = vmatpush1.bf16.msra.mxu0 0
    %561 = vmatprep.subr.bf16.mxu0 0
    %562 = vmatpush1.bf16.msra.mxu0 0
    %563 = vmatprep.subr.bf16.mxu0 0
    %564 = vmatpush1.bf16.msra.mxu0 0
    %565 = vmatprep.subr.bf16.mxu0 0
    %566 = vmatpush1.bf16.msra.mxu0 0
    %567 = vmatprep.subr.bf16.mxu0 0
    %568 = vmatpush1.bf16.msra.mxu0 0
    %569 = vmatprep.subr.bf16.mxu0 0
    %570 = vmatpush1.bf16.msra.mxu0 0
    %571 = vmatprep.subr.bf16.mxu0 0
    %572 = vmatpush1.bf16.msra.mxu0 0
    %573 = vmatprep.subr.bf16.mxu0 0
    %574 = vmatpush1.bf16.msra.mxu0 0
    %575 = vmatprep.mubr.bf16.mxu0 0
    %576 = vmatmul.mubr.bf16.gmra.mrb[0].mxu0 %v418
    %v577 = vpop.f32.mrb[0].mxu0
    %v578 = vadd.f32 0.0, %v577
    %v579 = vpop.f32.mrb[0].mxu0
    %v580 = vadd.f32 0.0, %v579
    %v581 = vpop.f32.mrb[0].mxu0
    %v582 = vpop.f32.mrb[0].mxu0
    %583 = vdwg.mxu0
    %v585 = vsel %vm416, %v413, 0
    %587 = vmatprep.subr.bf16.mxu0 %v369
    %588 = vmatpush1.bf16.msra.mxu0 %v368
    %589 = vmatprep.subr.bf16.mxu0 0
    %590 = vmatpush1.bf16.msra.mxu0 0
    %591 = vmatprep.subr.bf16.mxu0 0
    %592 = vmatpush1.bf16.msra.mxu0 0
    %593 = vmatprep.subr.bf16.mxu0 0
    %594 = vmatpush1.bf16.msra.mxu0 0
    %595 = vmatprep.subr.bf16.mxu0 0
    %596 = vmatpush1.bf16.msra.mxu0 0
    %597 = vmatprep.subr.bf16.mxu0 0
    %598 = vmatpush1.bf16.msra.mxu0 0
    %599 = vmatprep.subr.bf16.mxu0 0
    %600 = vmatpush1.bf16.msra.mxu0 0
    %601 = vmatprep.subr.bf16.mxu0 0
    %602 = vmatpush1.bf16.msra.mxu0 0
    %603 = vmatprep.subr.bf16.mxu0 0
    %604 = vmatpush1.bf16.msra.mxu0 0
    %605 = vmatprep.subr.bf16.mxu0 0
    %606 = vmatpush1.bf16.msra.mxu0 0
    %607 = vmatprep.subr.bf16.mxu0 0
    %608 = vmatpush1.bf16.msra.mxu0 0
    %609 = vmatprep.subr.bf16.mxu0 0
    %610 = vmatpush1.bf16.msra.mxu0 0
    %611 = vmatprep.subr.bf16.mxu0 0
    %612 = vmatpush1.bf16.msra.mxu0 0
    %613 = vmatprep.subr.bf16.mxu0 0
    %614 = vmatpush1.bf16.msra.mxu0 0
    %615 = vmatprep.subr.bf16.mxu0 0
    %616 = vmatpush1.bf16.msra.mxu0 0
    %617 = vmatprep.subr.bf16.mxu0 0
    %618 = vmatpush1.bf16.msra.mxu0 0
    %619 = vmatprep.mubr.bf16.mxu0 0
    %620 = vmatmul.mubr.bf16.gmra.mrb[0].mxu0 %v585
    %v621 = vpop.f32.mrb[0].mxu0
    %v622 = vadd.f32 0.0, %v621
    %v623 = vpop.f32.mrb[0].mxu0
    %v624 = vadd.f32 0.0, %v623
    %v625 = vpop.f32.mrb[0].mxu0
    %v626 = vpop.f32.mrb[0].mxu0
    %627 = vdwg.mxu0
    %628 = vmatprep.subr.bf16.mxu0 %v371
    %629 = vmatpush1.bf16.msra.mxu0 %v370
    %630 = vmatprep.subr.bf16.mxu0 0
    %631 = vmatpush1.bf16.msra.mxu0 0
    %632 = vmatprep.subr.bf16.mxu0 0
    %633 = vmatpush1.bf16.msra.mxu0 0
    %634 = vmatprep.subr.bf16.mxu0 0
    %635 = vmatpush1.bf16.msra.mxu0 0
    %636 = vmatprep.subr.bf16.mxu0 0
    %637 = vmatpush1.bf16.msra.mxu0 0
    %638 = vmatprep.subr.bf16.mxu0 0
    %639 = vmatpush1.bf16.msra.mxu0 0
    %640 = vmatprep.subr.bf16.mxu0 0
    %641 = vmatpush1.bf16.msra.mxu0 0
    %642 = vmatprep.subr.bf16.mxu0 0
    %643 = vmatpush1.bf16.msra.mxu0 0
    %644 = vmatprep.subr.bf16.mxu0 0
    %645 = vmatpush1.bf16.msra.mxu0 0
    %646 = vmatprep.subr.bf16.mxu0 0
    %647 = vmatpush1.bf16.msra.mxu0 0
    %648 = vmatprep.subr.bf16.mxu0 0
    %649 = vmatpush1.bf16.msra.mxu0 0
    %650 = vmatprep.subr.bf16.mxu0 0
    %651 = vmatpush1.bf16.msra.mxu0 0
    %652 = vmatprep.subr.bf16.mxu0 0
    %653 = vmatpush1.bf16.msra.mxu0 0
    %654 = vmatprep.subr.bf16.mxu0 0
    %655 = vmatpush1.bf16.msra.mxu0 0
    %656 = vmatprep.subr.bf16.mxu0 0
    %657 = vmatpush1.bf16.msra.mxu0 0
    %658 = vmatprep.subr.bf16.mxu0 0
    %659 = vmatpush1.bf16.msra.mxu0 0
    %660 = vmatprep.mubr.bf16.mxu0 0
    %661 = vmatmul.mubr.bf16.gmra.mrb[0].mxu0 %v585
    %v662 = vpop.f32.mrb[0].mxu0
    %v663 = vadd.f32 0.0, %v662
    %v664 = vpop.f32.mrb[0].mxu0
    %v665 = vadd.f32 0.0, %v664
    %v666 = vpop.f32.mrb[0].mxu0
    %v667 = vpop.f32.mrb[0].mxu0
    %668 = vdwg.mxu0
    %669 = vmatprep.subr.bf16.mxu0 %v373
    %670 = vmatpush1.bf16.msra.mxu0 %v372
    %671 = vmatprep.subr.bf16.mxu0 0
    %672 = vmatpush1.bf16.msra.mxu0 0
    %673 = vmatprep.subr.bf16.mxu0 0
    %674 = vmatpush1.bf16.msra.mxu0 0
    %675 = vmatprep.subr.bf16.mxu0 0
    %676 = vmatpush1.bf16.msra.mxu0 0
    %677 = vmatprep.subr.bf16.mxu0 0
    %678 = vmatpush1.bf16.msra.mxu0 0
    %679 = vmatprep.subr.bf16.mxu0 0
    %680 = vmatpush1.bf16.msra.mxu0 0
    %681 = vmatprep.subr.bf16.mxu0 0
    %682 = vmatpush1.bf16.msra.mxu0 0
    %683 = vmatprep.subr.bf16.mxu0 0
    %684 = vmatpush1.bf16.msra.mxu0 0
    %685 = vmatprep.subr.bf16.mxu0 0
    %686 = vmatpush1.bf16.msra.mxu0 0
    %687 = vmatprep.subr.bf16.mxu0 0
    %688 = vmatpush1.bf16.msra.mxu0 0
    %689 = vmatprep.subr.bf16.mxu0 0
    %690 = vmatpush1.bf16.msra.mxu0 0
    %691 = vmatprep.subr.bf16.mxu0 0
    %692 = vmatpush1.bf16.msra.mxu0 0
    %693 = vmatprep.subr.bf16.mxu0 0
    %694 = vmatpush1.bf16.msra.mxu0 0
    %695 = vmatprep.subr.bf16.mxu0 0
    %696 = vmatpush1.bf16.msra.mxu0 0
    %697 = vmatprep.subr.bf16.mxu0 0
    %698 = vmatpush1.bf16.msra.mxu0 0
    %699 = vmatprep.subr.bf16.mxu0 0
    %700 = vmatpush1.bf16.msra.mxu0 0
    %701 = vmatprep.mubr.bf16.mxu0 0
    %702 = vmatmul.mubr.bf16.gmra.mrb[0].mxu0 %v585
    %v703 = vpop.f32.mrb[0].mxu0
    %v704 = vadd.f32 0.0, %v703
    %v705 = vpop.f32.mrb[0].mxu0
    %v706 = vadd.f32 0.0, %v705
    %v707 = vpop.f32.mrb[0].mxu0
    %v708 = vpop.f32.mrb[0].mxu0
    %709 = vdwg.mxu0
    %710 = vmatprep.subr.bf16.mxu0 %v375
    %711 = vmatpush1.bf16.msra.mxu0 %v374
    %712 = vmatprep.subr.bf16.mxu0 0
    %713 = vmatpush1.bf16.msra.mxu0 0
    %714 = vmatprep.subr.bf16.mxu0 0
    %715 = vmatpush1.bf16.msra.mxu0 0
    %716 = vmatprep.subr.bf16.mxu0 0
    %717 = vmatpush1.bf16.msra.mxu0 0
    %718 = vmatprep.subr.bf16.mxu0 0
    %719 = vmatpush1.bf16.msra.mxu0 0
    %720 = vmatprep.subr.bf16.mxu0 0
    %721 = vmatpush1.bf16.msra.mxu0 0
    %722 = vmatprep.subr.bf16.mxu0 0
    %723 = vmatpush1.bf16.msra.mxu0 0
    %724 = vmatprep.subr.bf16.mxu0 0
    %725 = vmatpush1.bf16.msra.mxu0 0
    %726 = vmatprep.subr.bf16.mxu0 0
    %727 = vmatpush1.bf16.msra.mxu0 0
    %728 = vmatprep.subr.bf16.mxu0 0
    %729 = vmatpush1.bf16.msra.mxu0 0
    %730 = vmatprep.subr.bf16.mxu0 0
    %731 = vmatpush1.bf16.msra.mxu0 0
    %732 = vmatprep.subr.bf16.mxu0 0
    %733 = vmatpush1.bf16.msra.mxu0 0
    %734 = vmatprep.subr.bf16.mxu0 0
    %735 = vmatpush1.bf16.msra.mxu0 0
    %736 = vmatprep.subr.bf16.mxu0 0
    %737 = vmatpush1.bf16.msra.mxu0 0
    %738 = vmatprep.subr.bf16.mxu0 0
    %739 = vmatpush1.bf16.msra.mxu0 0
    %740 = vmatprep.subr.bf16.mxu0 0
    %741 = vmatpush1.bf16.msra.mxu0 0
    %742 = vmatprep.mubr.bf16.mxu0 0
    %743 = vmatmul.mubr.bf16.gmra.mrb[0].mxu0 %v585
    %v744 = vpop.f32.mrb[0].mxu0
    %v745 = vadd.f32 0.0, %v744
    %v746 = vpop.f32.mrb[0].mxu0
    %v747 = vadd.f32 0.0, %v746
    %v748 = vpop.f32.mrb[0].mxu0
    %v749 = vpop.f32.mrb[0].mxu0
    %750 = vdwg.mxu0
    %v752 = vsel %vm416, %v414, 0
    %754 = vmatprep.subr.bf16.mxu0 %v377
    %755 = vmatpush1.bf16.msra.mxu0 %v376
    %756 = vmatprep.subr.bf16.mxu0 0
    %757 = vmatpush1.bf16.msra.mxu0 0
    %758 = vmatprep.subr.bf16.mxu0 0
    %759 = vmatpush1.bf16.msra.mxu0 0
    %760 = vmatprep.subr.bf16.mxu0 0
    %761 = vmatpush1.bf16.msra.mxu0 0
    %762 = vmatprep.subr.bf16.mxu0 0
    %763 = vmatpush1.bf16.msra.mxu0 0
    %764 = vmatprep.subr.bf16.mxu0 0
    %765 = vmatpush1.bf16.msra.mxu0 0
    %766 = vmatprep.subr.bf16.mxu0 0
    %767 = vmatpush1.bf16.msra.mxu0 0
    %768 = vmatprep.subr.bf16.mxu0 0
    %769 = vmatpush1.bf16.msra.mxu0 0
    %770 = vmatprep.subr.bf16.mxu0 0
    %771 = vmatpush1.bf16.msra.mxu0 0
    %772 = vmatprep.subr.bf16.mxu0 0
    %773 = vmatpush1.bf16.msra.mxu0 0
    %774 = vmatprep.subr.bf16.mxu0 0
    %775 = vmatpush1.bf16.msra.mxu0 0
    %776 = vmatprep.subr.bf16.mxu0 0
    %777 = vmatpush1.bf16.msra.mxu0 0
    %778 = vmatprep.subr.bf16.mxu0 0
    %779 = vmatpush1.bf16.msra.mxu0 0
    %780 = vmatprep.subr.bf16.mxu0 0
    %781 = vmatpush1.bf16.msra.mxu0 0
    %782 = vmatprep.subr.bf16.mxu0 0
    %783 = vmatpush1.bf16.msra.mxu0 0
    %784 = vmatprep.subr.bf16.mxu0 0
    %785 = vmatpush1.bf16.msra.mxu0 0
    %786 = vmatprep.mubr.bf16.mxu0 0
    %787 = vmatmul.mubr.bf16.gmra.mrb[0].mxu0 %v752
    %v788 = vpop.f32.mrb[0].mxu0
    %v789 = vadd.f32 0.0, %v788
    %v790 = vpop.f32.mrb[0].mxu0
    %v791 = vadd.f32 0.0, %v790
    %v792 = vpop.f32.mrb[0].mxu0
    %v793 = vpop.f32.mrb[0].mxu0
    %794 = vdwg.mxu0
    %795 = vmatprep.subr.bf16.mxu0 %v379
    %796 = vmatpush1.bf16.msra.mxu0 %v378
    %797 = vmatprep.subr.bf16.mxu0 0
    %798 = vmatpush1.bf16.msra.mxu0 0
    %799 = vmatprep.subr.bf16.mxu0 0
    %800 = vmatpush1.bf16.msra.mxu0 0
    %801 = vmatprep.subr.bf16.mxu0 0
    %802 = vmatpush1.bf16.msra.mxu0 0
    %803 = vmatprep.subr.bf16.mxu0 0
    %804 = vmatpush1.bf16.msra.mxu0 0
    %805 = vmatprep.subr.bf16.mxu0 0
    %806 = vmatpush1.bf16.msra.mxu0 0
    %807 = vmatprep.subr.bf16.mxu0 0
    %808 = vmatpush1.bf16.msra.mxu0 0
    %809 = vmatprep.subr.bf16.mxu0 0
    %810 = vmatpush1.bf16.msra.mxu0 0
    %811 = vmatprep.subr.bf16.mxu0 0
    %812 = vmatpush1.bf16.msra.mxu0 0
    %813 = vmatprep.subr.bf16.mxu0 0
    %814 = vmatpush1.bf16.msra.mxu0 0
    %815 = vmatprep.subr.bf16.mxu0 0
    %816 = vmatpush1.bf16.msra.mxu0 0
    %817 = vmatprep.subr.bf16.mxu0 0
    %818 = vmatpush1.bf16.msra.mxu0 0
    %819 = vmatprep.subr.bf16.mxu0 0
    %820 = vmatpush1.bf16.msra.mxu0 0
    %821 = vmatprep.subr.bf16.mxu0 0
    %822 = vmatpush1.bf16.msra.mxu0 0
    %823 = vmatprep.subr.bf16.mxu0 0
    %824 = vmatpush1.bf16.msra.mxu0 0
    %825 = vmatprep.subr.bf16.mxu0 0
    %826 = vmatpush1.bf16.msra.mxu0 0
    %827 = vmatprep.mubr.bf16.mxu0 0
    %828 = vmatmul.mubr.bf16.gmra.mrb[0].mxu0 %v752
    %v829 = vpop.f32.mrb[0].mxu0
    %v830 = vadd.f32 0.0, %v829
    %v831 = vpop.f32.mrb[0].mxu0
    %v832 = vadd.f32 0.0, %v831
    %v833 = vpop.f32.mrb[0].mxu0
    %v834 = vpop.f32.mrb[0].mxu0
    %835 = vdwg.mxu0
    %836 = vmatprep.subr.bf16.mxu0 %v381
    %837 = vmatpush1.bf16.msra.mxu0 %v380
    %838 = vmatprep.subr.bf16.mxu0 0
    %839 = vmatpush1.bf16.msra.mxu0 0
    %840 = vmatprep.subr.bf16.mxu0 0
    %841 = vmatpush1.bf16.msra.mxu0 0
    %842 = vmatprep.subr.bf16.mxu0 0
    %843 = vmatpush1.bf16.msra.mxu0 0
    %844 = vmatprep.subr.bf16.mxu0 0
    %845 = vmatpush1.bf16.msra.mxu0 0
    %846 = vmatprep.subr.bf16.mxu0 0
    %847 = vmatpush1.bf16.msra.mxu0 0
    %848 = vmatprep.subr.bf16.mxu0 0
    %849 = vmatpush1.bf16.msra.mxu0 0
    %850 = vmatprep.subr.bf16.mxu0 0
    %851 = vmatpush1.bf16.msra.mxu0 0
    %852 = vmatprep.subr.bf16.mxu0 0
    %853 = vmatpush1.bf16.msra.mxu0 0
    %854 = vmatprep.subr.bf16.mxu0 0
    %855 = vmatpush1.bf16.msra.mxu0 0
    %856 = vmatprep.subr.bf16.mxu0 0
    %857 = vmatpush1.bf16.msra.mxu0 0
    %858 = vmatprep.subr.bf16.mxu0 0
    %859 = vmatpush1.bf16.msra.mxu0 0
    %860 = vmatprep.subr.bf16.mxu0 0
    %861 = vmatpush1.bf16.msra.mxu0 0
    %862 = vmatprep.subr.bf16.mxu0 0
    %863 = vmatpush1.bf16.msra.mxu0 0
    %864 = vmatprep.subr.bf16.mxu0 0
    %865 = vmatpush1.bf16.msra.mxu0 0
    %866 = vmatprep.subr.bf16.mxu0 0
    %867 = vmatpush1.bf16.msra.mxu0 0
    %868 = vmatprep.mubr.bf16.mxu0 0
    %869 = vmatmul.mubr.bf16.gmra.mrb[0].mxu0 %v752
    %v870 = vpop.f32.mrb[0].mxu0
    %v871 = vadd.f32 0.0, %v870
    %v872 = vpop.f32.mrb[0].mxu0
    %v873 = vadd.f32 0.0, %v872
    %v874 = vpop.f32.mrb[0].mxu0
    %v875 = vpop.f32.mrb[0].mxu0
    %876 = vdwg.mxu0
    %877 = vmatprep.subr.bf16.mxu0 %v383
    %878 = vmatpush1.bf16.msra.mxu0 %v382
    %879 = vmatprep.subr.bf16.mxu0 0
    %880 = vmatpush1.bf16.msra.mxu0 0
    %881 = vmatprep.subr.bf16.mxu0 0
    %882 = vmatpush1.bf16.msra.mxu0 0
    %883 = vmatprep.subr.bf16.mxu0 0
    %884 = vmatpush1.bf16.msra.mxu0 0
    %885 = vmatprep.subr.bf16.mxu0 0
    %886 = vmatpush1.bf16.msra.mxu0 0
    %887 = vmatprep.subr.bf16.mxu0 0
    %888 = vmatpush1.bf16.msra.mxu0 0
    %889 = vmatprep.subr.bf16.mxu0 0
    %890 = vmatpush1.bf16.msra.mxu0 0
    %891 = vmatprep.subr.bf16.mxu0 0
    %892 = vmatpush1.bf16.msra.mxu0 0
    %893 = vmatprep.subr.bf16.mxu0 0
    %894 = vmatpush1.bf16.msra.mxu0 0
    %895 = vmatprep.subr.bf16.mxu0 0
    %896 = vmatpush1.bf16.msra.mxu0 0
    %897 = vmatprep.subr.bf16.mxu0 0
    %898 = vmatpush1.bf16.msra.mxu0 0
    %899 = vmatprep.subr.bf16.mxu0 0
    %900 = vmatpush1.bf16.msra.mxu0 0
    %901 = vmatprep.subr.bf16.mxu0 0
    %902 = vmatpush1.bf16.msra.mxu0 0
    %903 = vmatprep.subr.bf16.mxu0 0
    %904 = vmatpush1.bf16.msra.mxu0 0
    %905 = vmatprep.subr.bf16.mxu0 0
    %906 = vmatpush1.bf16.msra.mxu0 0
    %907 = vmatprep.subr.bf16.mxu0 0
    %908 = vmatpush1.bf16.msra.mxu0 0
    %909 = vmatprep.mubr.bf16.mxu0 0
    %910 = vmatmul.mubr.bf16.gmra.mrb[0].mxu0 %v752
    %v911 = vpop.f32.mrb[0].mxu0
    %v912 = vadd.f32 0.0, %v911
    %v913 = vpop.f32.mrb[0].mxu0
    %v914 = vadd.f32 0.0, %v913
    %v915 = vpop.f32.mrb[0].mxu0
    %v916 = vpop.f32.mrb[0].mxu0
    %917 = vdwg.mxu0
    %v919 = vsel %vm416, %v415, 0
    %921 = vmatprep.subr.bf16.mxu0 %v385
    %922 = vmatpush1.bf16.msra.mxu0 %v384
    %923 = vmatprep.subr.bf16.mxu0 0
    %924 = vmatpush1.bf16.msra.mxu0 0
    %925 = vmatprep.subr.bf16.mxu0 0
    %926 = vmatpush1.bf16.msra.mxu0 0
    %927 = vmatprep.subr.bf16.mxu0 0
    %928 = vmatpush1.bf16.msra.mxu0 0
    %929 = vmatprep.subr.bf16.mxu0 0
    %930 = vmatpush1.bf16.msra.mxu0 0
    %931 = vmatprep.subr.bf16.mxu0 0
    %932 = vmatpush1.bf16.msra.mxu0 0
    %933 = vmatprep.subr.bf16.mxu0 0
    %934 = vmatpush1.bf16.msra.mxu0 0
    %935 = vmatprep.subr.bf16.mxu0 0
    %936 = vmatpush1.bf16.msra.mxu0 0
    %937 = vmatprep.subr.bf16.mxu0 0
    %938 = vmatpush1.bf16.msra.mxu0 0
    %939 = vmatprep.subr.bf16.mxu0 0
    %940 = vmatpush1.bf16.msra.mxu0 0
    %941 = vmatprep.subr.bf16.mxu0 0
    %942 = vmatpush1.bf16.msra.mxu0 0
    %943 = vmatprep.subr.bf16.mxu0 0
    %944 = vmatpush1.bf16.msra.mxu0 0
    %945 = vmatprep.subr.bf16.mxu0 0
    %946 = vmatpush1.bf16.msra.mxu0 0
    %947 = vmatprep.subr.bf16.mxu0 0
    %948 = vmatpush1.bf16.msra.mxu0 0
    %949 = vmatprep.subr.bf16.mxu0 0
    %950 = vmatpush1.bf16.msra.mxu0 0
    %951 = vmatprep.subr.bf16.mxu0 0
    %952 = vmatpush1.bf16.msra.mxu0 0
    %953 = vmatprep.mubr.bf16.mxu0 0
    %954 = vmatmul.mubr.bf16.gmra.mrb[0].mxu0 %v919
    %v955 = vpop.f32.mrb[0].mxu0
    %v956 = vadd.f32 0.0, %v955
    %v957 = vpop.f32.mrb[0].mxu0
    %v958 = vadd.f32 0.0, %v957
    %v959 = vpop.f32.mrb[0].mxu0
    %v960 = vpop.f32.mrb[0].mxu0
    %961 = vdwg.mxu0
    %962 = vmatprep.subr.bf16.mxu0 %v387
    %963 = vmatpush1.bf16.msra.mxu0 %v386
    %964 = vmatprep.subr.bf16.mxu0 0
    %965 = vmatpush1.bf16.msra.mxu0 0
    %966 = vmatprep.subr.bf16.mxu0 0
    %967 = vmatpush1.bf16.msra.mxu0 0
    %968 = vmatprep.subr.bf16.mxu0 0
    %969 = vmatpush1.bf16.msra.mxu0 0
    %970 = vmatprep.subr.bf16.mxu0 0
    %971 = vmatpush1.bf16.msra.mxu0 0
    %972 = vmatprep.subr.bf16.mxu0 0
    %973 = vmatpush1.bf16.msra.mxu0 0
    %974 = vmatprep.subr.bf16.mxu0 0
    %975 = vmatpush1.bf16.msra.mxu0 0
    %976 = vmatprep.subr.bf16.mxu0 0
    %977 = vmatpush1.bf16.msra.mxu0 0
    %978 = vmatprep.subr.bf16.mxu0 0
    %979 = vmatpush1.bf16.msra.mxu0 0
    %980 = vmatprep.subr.bf16.mxu0 0
    %981 = vmatpush1.bf16.msra.mxu0 0
    %982 = vmatprep.subr.bf16.mxu0 0
    %983 = vmatpush1.bf16.msra.mxu0 0
    %984 = vmatprep.subr.bf16.mxu0 0
    %985 = vmatpush1.bf16.msra.mxu0 0
    %986 = vmatprep.subr.bf16.mxu0 0
    %987 = vmatpush1.bf16.msra.mxu0 0
    %988 = vmatprep.subr.bf16.mxu0 0
    %989 = vmatpush1.bf16.msra.mxu0 0
    %990 = vmatprep.subr.bf16.mxu0 0
    %991 = vmatpush1.bf16.msra.mxu0 0
    %992 = vmatprep.subr.bf16.mxu0 0
    %993 = vmatpush1.bf16.msra.mxu0 0
    %994 = vmatprep.mubr.bf16.mxu0 0
    %995 = vmatmul.mubr.bf16.gmra.mrb[0].mxu0 %v919
    %v996 = vpop.f32.mrb[0].mxu0
    %v997 = vadd.f32 0.0, %v996
    %v998 = vpop.f32.mrb[0].mxu0
    %v999 = vadd.f32 0.0, %v998
    %v1000 = vpop.f32.mrb[0].mxu0
    %v1001 = vpop.f32.mrb[0].mxu0
    %1002 = vdwg.mxu0
    %1003 = vmatprep.subr.bf16.mxu0 %v389
    %1004 = vmatpush1.bf16.msra.mxu0 %v388
    %1005 = vmatprep.subr.bf16.mxu0 0
    %1006 = vmatpush1.bf16.msra.mxu0 0
    %1007 = vmatprep.subr.bf16.mxu0 0
    %1008 = vmatpush1.bf16.msra.mxu0 0
    %1009 = vmatprep.subr.bf16.mxu0 0
    %1010 = vmatpush1.bf16.msra.mxu0 0
    %1011 = vmatprep.subr.bf16.mxu0 0
    %1012 = vmatpush1.bf16.msra.mxu0 0
    %1013 = vmatprep.subr.bf16.mxu0 0
    %1014 = vmatpush1.bf16.msra.mxu0 0
    %1015 = vmatprep.subr.bf16.mxu0 0
    %1016 = vmatpush1.bf16.msra.mxu0 0
    %1017 = vmatprep.subr.bf16.mxu0 0
    %1018 = vmatpush1.bf16.msra.mxu0 0
    %1019 = vmatprep.subr.bf16.mxu0 0
    %1020 = vmatpush1.bf16.msra.mxu0 0
    %1021 = vmatprep.subr.bf16.mxu0 0
    %1022 = vmatpush1.bf16.msra.mxu0 0
    %1023 = vmatprep.subr.bf16.mxu0 0
    %1024 = vmatpush1.bf16.msra.mxu0 0
    %1025 = vmatprep.subr.bf16.mxu0 0
    %1026 = vmatpush1.bf16.msra.mxu0 0
    %1027 = vmatprep.subr.bf16.mxu0 0
    %1028 = vmatpush1.bf16.msra.mxu0 0
    %1029 = vmatprep.subr.bf16.mxu0 0
    %1030 = vmatpush1.bf16.msra.mxu0 0
    %1031 = vmatprep.subr.bf16.mxu0 0
    %1032 = vmatpush1.bf16.msra.mxu0 0
    %1033 = vmatprep.subr.bf16.mxu0 0
    %1034 = vmatpush1.bf16.msra.mxu0 0
    %1035 = vmatprep.mubr.bf16.mxu0 0
    %1036 = vmatmul.mubr.bf16.gmra.mrb[0].mxu0 %v919
    %v1037 = vpop.f32.mrb[0].mxu0
    %v1038 = vadd.f32 0.0, %v1037
    %v1039 = vpop.f32.mrb[0].mxu0
    %v1040 = vadd.f32 0.0, %v1039
    %v1041 = vpop.f32.mrb[0].mxu0
    %v1042 = vpop.f32.mrb[0].mxu0
    %1043 = vdwg.mxu0
    %1044 = vmatprep.subr.bf16.mxu0 %v391
    %1045 = vmatpush1.bf16.msra.mxu0 %v390
    %1046 = vmatprep.subr.bf16.mxu0 0
    %1047 = vmatpush1.bf16.msra.mxu0 0
    %1048 = vmatprep.subr.bf16.mxu0 0
    %1049 = vmatpush1.bf16.msra.mxu0 0
    %1050 = vmatprep.subr.bf16.mxu0 0
    %1051 = vmatpush1.bf16.msra.mxu0 0
    %1052 = vmatprep.subr.bf16.mxu0 0
    %1053 = vmatpush1.bf16.msra.mxu0 0
    %1054 = vmatprep.subr.bf16.mxu0 0
    %1055 = vmatpush1.bf16.msra.mxu0 0
    %1056 = vmatprep.subr.bf16.mxu0 0
    %1057 = vmatpush1.bf16.msra.mxu0 0
    %1058 = vmatprep.subr.bf16.mxu0 0
    %1059 = vmatpush1.bf16.msra.mxu0 0
    %1060 = vmatprep.subr.bf16.mxu0 0
    %1061 = vmatpush1.bf16.msra.mxu0 0
    %1062 = vmatprep.subr.bf16.mxu0 0
    %1063 = vmatpush1.bf16.msra.mxu0 0
    %1064 = vmatprep.subr.bf16.mxu0 0
    %1065 = vmatpush1.bf16.msra.mxu0 0
    %1066 = vmatprep.subr.bf16.mxu0 0
    %1067 = vmatpush1.bf16.msra.mxu0 0
    %1068 = vmatprep.subr.bf16.mxu0 0
    %1069 = vmatpush1.bf16.msra.mxu0 0
    %1070 = vmatprep.subr.bf16.mxu0 0
    %1071 = vmatpush1.bf16.msra.mxu0 0
    %1072 = vmatprep.subr.bf16.mxu0 0
    %1073 = vmatpush1.bf16.msra.mxu0 0
    %1074 = vmatprep.subr.bf16.mxu0 0
    %1075 = vmatpush1.bf16.msra.mxu0 0
    %1076 = vmatprep.mubr.bf16.mxu0 0
    %1077 = vmatmul.mubr.bf16.gmra.mrb[0].mxu0 %v919
    %v1078 = vpop.f32.mrb[0].mxu0
    %v1079 = vadd.f32 0.0, %v1078
    %v1080 = vpop.f32.mrb[0].mxu0
    %v1081 = vadd.f32 0.0, %v1080
    %v1082 = vpop.f32.mrb[0].mxu0
    %v1083 = vpop.f32.mrb[0].mxu0
    %1084 = vdwg.mxu0
    %v1085 = vld [vmem:[#allocation7] sm:$0xff]
    %v1086 = vld [vmem:[#allocation7 + $0x8] sm:$0xff]
    %v1087 = vld [vmem:[#allocation7 + $0x10] sm:$0xff]
    %v1088 = vld [vmem:[#allocation7 + $0x18] sm:$0xff]
    %v1089 = vld [vmem:[#allocation7 + $0x20] sm:$0xff]
    %v1090 = vld [vmem:[#allocation7 + $0x28] sm:$0xff]
    %v1091 = vld [vmem:[#allocation7 + $0x30] sm:$0xff]
    %v1092 = vld [vmem:[#allocation7 + $0x38] sm:$0xff]
    %v1093 = vld [vmem:[#allocation7 + $0x40] sm:$0xff]
    %v1094 = vld [vmem:[#allocation7 + $0x48] sm:$0xff]
    %v1095 = vld [vmem:[#allocation7 + $0x50] sm:$0xff]
    %v1096 = vld [vmem:[#allocation7 + $0x58] sm:$0xff]
    %v1097 = vld [vmem:[#allocation7 + $0x60] sm:$0xff]
    %v1098 = vld [vmem:[#allocation7 + $0x68] sm:$0xff]
    %v1099 = vld [vmem:[#allocation7 + $0x70] sm:$0xff]
    %v1100 = vld [vmem:[#allocation7 + $0x78] sm:$0xff]
    %v1101 = vld [vmem:[#allocation7 + $0x80] sm:$0xff]
    %v1102 = vld [vmem:[#allocation7 + $0x88] sm:$0xff]
    %v1103 = vld [vmem:[#allocation7 + $0x90] sm:$0xff]
    %v1104 = vld [vmem:[#allocation7 + $0x98] sm:$0xff]
    %v1105 = vld [vmem:[#allocation7 + $0xa0] sm:$0xff]
    %v1106 = vld [vmem:[#allocation7 + $0xa8] sm:$0xff]
    %v1107 = vld [vmem:[#allocation7 + $0xb0] sm:$0xff]
    %v1108 = vld [vmem:[#allocation7 + $0xb8] sm:$0xff]
    %v1109 = vld [vmem:[#allocation7 + $0xc0] sm:$0xff]
    %v1110 = vld [vmem:[#allocation7 + $0xc8] sm:$0xff]
    %v1111 = vld [vmem:[#allocation7 + $0xd0] sm:$0xff]
    %v1112 = vld [vmem:[#allocation7 + $0xd8] sm:$0xff]
    %v1113 = vld [vmem:[#allocation7 + $0xe0] sm:$0xff]
    %v1114 = vld [vmem:[#allocation7 + $0xe8] sm:$0xff]
    %v1115 = vld [vmem:[#allocation7 + $0xf0] sm:$0xff]
    %v1116 = vld [vmem:[#allocation7 + $0xf8] sm:$0xff]
    %v1117 = vld [vmem:[#allocation7 + $0x100] sm:$0xff]
    %v1118 = vld [vmem:[#allocation7 + $0x108] sm:$0xff]
    %v1119 = vld [vmem:[#allocation7 + $0x110] sm:$0xff]
    %v1120 = vld [vmem:[#allocation7 + $0x118] sm:$0xff]
    %v1121 = vld [vmem:[#allocation7 + $0x120] sm:$0xff]
    %v1122 = vld [vmem:[#allocation7 + $0x128] sm:$0xff]
    %v1123 = vld [vmem:[#allocation7 + $0x130] sm:$0xff]
    %v1124 = vld [vmem:[#allocation7 + $0x138] sm:$0xff]
    %v1125 = vld [vmem:[#allocation7 + $0x140] sm:$0xff]
    %v1126 = vld [vmem:[#allocation7 + $0x148] sm:$0xff]
    %v1127 = vld [vmem:[#allocation7 + $0x150] sm:$0xff]
    %v1128 = vld [vmem:[#allocation7 + $0x158] sm:$0xff]
    %v1129 = vld [vmem:[#allocation7 + $0x160] sm:$0xff]
    %v1130 = vld [vmem:[#allocation7 + $0x168] sm:$0xff]
    %v1131 = vld [vmem:[#allocation7 + $0x170] sm:$0xff]
    %v1132 = vld [vmem:[#allocation7 + $0x178] sm:$0xff]
    %v1133 = vld [vmem:[#allocation7 + $0x180] sm:$0xff]
    %v1134 = vld [vmem:[#allocation7 + $0x188] sm:$0xff]
    %v1135 = vld [vmem:[#allocation7 + $0x190] sm:$0xff]
    %v1136 = vld [vmem:[#allocation7 + $0x198] sm:$0xff]
    %v1137 = vld [vmem:[#allocation7 + $0x1a0] sm:$0xff]
    %v1138 = vld [vmem:[#allocation7 + $0x1a8] sm:$0xff]
    %v1139 = vld [vmem:[#allocation7 + $0x1b0] sm:$0xff]
    %v1140 = vld [vmem:[#allocation7 + $0x1b8] sm:$0xff]
    %v1141 = vld [vmem:[#allocation7 + $0x1c0] sm:$0xff]
    %v1142 = vld [vmem:[#allocation7 + $0x1c8] sm:$0xff]
    %v1143 = vld [vmem:[#allocation7 + $0x1d0] sm:$0xff]
    %v1144 = vld [vmem:[#allocation7 + $0x1d8] sm:$0xff]
    %v1145 = vld [vmem:[#allocation7 + $0x1e0] sm:$0xff]
    %v1146 = vld [vmem:[#allocation7 + $0x1e8] sm:$0xff]
    %v1147 = vld [vmem:[#allocation7 + $0x1f0] sm:$0xff]
    %v1148 = vld [vmem:[#allocation7 + $0x1f8] sm:$0xff]
    %v1149 = vld [vmem:[#allocation7 + $0x200] sm:$0xff]
    %v1150 = vld [vmem:[#allocation7 + $0x208] sm:$0xff]
    %v1151 = vld [vmem:[#allocation7 + $0x210] sm:$0xff]
    %v1152 = vld [vmem:[#allocation7 + $0x218] sm:$0xff]
    %v1153 = vld [vmem:[#allocation7 + $0x220] sm:$0xff]
    %v1154 = vld [vmem:[#allocation7 + $0x228] sm:$0xff]
    %v1155 = vld [vmem:[#allocation7 + $0x230] sm:$0xff]
    %v1156 = vld [vmem:[#allocation7 + $0x238] sm:$0xff]
    %v1157 = vld [vmem:[#allocation7 + $0x240] sm:$0xff]
    %v1158 = vld [vmem:[#allocation7 + $0x248] sm:$0xff]
    %v1159 = vld [vmem:[#allocation7 + $0x250] sm:$0xff]
    %v1160 = vld [vmem:[#allocation7 + $0x258] sm:$0xff]
    %v1161 = vld [vmem:[#allocation7 + $0x260] sm:$0xff]
    %v1162 = vld [vmem:[#allocation7 + $0x268] sm:$0xff]
    %v1163 = vld [vmem:[#allocation7 + $0x270] sm:$0xff]
    %v1164 = vld [vmem:[#allocation7 + $0x278] sm:$0xff]
    %v1165 = vld [vmem:[#allocation7 + $0x280] sm:$0xff]
    %v1166 = vld [vmem:[#allocation7 + $0x288] sm:$0xff]
    %v1167 = vld [vmem:[#allocation7 + $0x290] sm:$0xff]
    %v1168 = vld [vmem:[#allocation7 + $0x298] sm:$0xff]
    %v1169 = vld [vmem:[#allocation7 + $0x2a0] sm:$0xff]
    %v1170 = vld [vmem:[#allocation7 + $0x2a8] sm:$0xff]
    %v1171 = vld [vmem:[#allocation7 + $0x2b0] sm:$0xff]
    %v1172 = vld [vmem:[#allocation7 + $0x2b8] sm:$0xff]
    %v1173 = vld [vmem:[#allocation7 + $0x2c0] sm:$0xff]
    %v1174 = vld [vmem:[#allocation7 + $0x2c8] sm:$0xff]
    %v1175 = vld [vmem:[#allocation7 + $0x2d0] sm:$0xff]
    %v1176 = vld [vmem:[#allocation7 + $0x2d8] sm:$0xff]
    %v1177 = vld [vmem:[#allocation7 + $0x2e0] sm:$0xff]
    %v1178 = vld [vmem:[#allocation7 + $0x2e8] sm:$0xff]
    %v1179 = vld [vmem:[#allocation7 + $0x2f0] sm:$0xff]
    %v1180 = vld [vmem:[#allocation7 + $0x2f8] sm:$0xff]
    %v1181 = vld [vmem:[#allocation7 + $0x300] sm:$0xff]
    %v1182 = vld [vmem:[#allocation7 + $0x308] sm:$0xff]
    %v1183 = vld [vmem:[#allocation7 + $0x310] sm:$0xff]
    %v1184 = vld [vmem:[#allocation7 + $0x318] sm:$0xff]
    %v1185 = vld [vmem:[#allocation7 + $0x320] sm:$0xff]
    %v1186 = vld [vmem:[#allocation7 + $0x328] sm:$0xff]
    %v1187 = vld [vmem:[#allocation7 + $0x330] sm:$0xff]
    %v1188 = vld [vmem:[#allocation7 + $0x338] sm:$0xff]
    %v1189 = vld [vmem:[#allocation7 + $0x340] sm:$0xff]
    %v1190 = vld [vmem:[#allocation7 + $0x348] sm:$0xff]
    %v1191 = vld [vmem:[#allocation7 + $0x350] sm:$0xff]
    %v1192 = vld [vmem:[#allocation7 + $0x358] sm:$0xff]
    %v1193 = vld [vmem:[#allocation7 + $0x360] sm:$0xff]
    %v1194 = vld [vmem:[#allocation7 + $0x368] sm:$0xff]
    %v1195 = vld [vmem:[#allocation7 + $0x370] sm:$0xff]
    %v1196 = vld [vmem:[#allocation7 + $0x378] sm:$0xff]
    %v1197 = vld [vmem:[#allocation7 + $0x380] sm:$0xff]
    %v1198 = vld [vmem:[#allocation7 + $0x388] sm:$0xff]
    %v1199 = vld [vmem:[#allocation7 + $0x390] sm:$0xff]
    %v1200 = vld [vmem:[#allocation7 + $0x398] sm:$0xff]
    %v1201 = vld [vmem:[#allocation7 + $0x3a0] sm:$0xff]
    %v1202 = vld [vmem:[#allocation7 + $0x3a8] sm:$0xff]
    %v1203 = vld [vmem:[#allocation7 + $0x3b0] sm:$0xff]
    %v1204 = vld [vmem:[#allocation7 + $0x3b8] sm:$0xff]
    %v1205 = vld [vmem:[#allocation7 + $0x3c0] sm:$0xff]
    %v1206 = vld [vmem:[#allocation7 + $0x3c8] sm:$0xff]
    %v1207 = vld [vmem:[#allocation7 + $0x3d0] sm:$0xff]
    %v1208 = vld [vmem:[#allocation7 + $0x3d8] sm:$0xff]
    %v1209 = vld [vmem:[#allocation7 + $0x3e0] sm:$0xff]
    %v1210 = vld [vmem:[#allocation7 + $0x3e8] sm:$0xff]
    %v1211 = vld [vmem:[#allocation7 + $0x3f0] sm:$0xff]
    %v1212 = vld [vmem:[#allocation7 + $0x3f8] sm:$0xff]
    %1213 = vmatprep.subr.mxu0 %v457
    %1214 = vmatpush1.xpose.msra.mxu0 %v455
    %1215 = vmatprep.subr.mxu0 0.0
    %1216 = vmatpush1.xpose.msra.mxu0 0.0
    %1217 = vmatprep.subr.mxu0 0.0
    %1218 = vmatpush1.xpose.msra.mxu0 0.0
    %1219 = vmatprep.subr.mxu0 0.0
    %1220 = vmatpush1.xpose.msra.mxu0 0.0
    %1221 = vmatprep.subr.mxu0 0.0
    %1222 = vmatpush1.xpose.msra.mxu0 0.0
    %1223 = vmatprep.subr.mxu0 0.0
    %1224 = vmatpush1.xpose.msra.mxu0 0.0
    %1225 = vmatprep.subr.mxu0 0.0
    %1226 = vmatpush1.xpose.msra.mxu0 0.0
    %1227 = vmatprep.subr.mxu0 0.0
    %1228 = vmatpush1.xpose.msra.mxu0 0.0
    %1229 = vmatprep.subr.mxu0 0.0
    %1230 = vmatpush1.xpose.msra.mxu0 0.0
    %1231 = vmatprep.subr.mxu0 0.0
    %1232 = vmatpush1.xpose.msra.mxu0 0.0
    %1233 = vmatprep.subr.mxu0 0.0
    %1234 = vmatpush1.xpose.msra.mxu0 0.0
    %1235 = vmatprep.subr.mxu0 0.0
    %1236 = vmatpush1.xpose.msra.mxu0 0.0
    %1237 = vmatprep.subr.mxu0 0.0
    %1238 = vmatpush1.xpose.msra.mxu0 0.0
    %1239 = vmatprep.subr.mxu0 0.0
    %1240 = vmatpush1.xpose.msra.mxu0 0.0
    %1241 = vmatprep.subr.mxu0 0.0
    %1242 = vmatpush1.xpose.msra.mxu0 0.0
    %1243 = vmatprep.subr.mxu0 0.0
    %1244 = vmatpush1.xpose.msra.mxu0 0.0
    %1245 = vmatprep.subr.mxu0 0.0
    %1246 = vmatpush1.xpose.msra.mxu0 0.0
    %1247 = vmatprep.subr.mxu0 0.0
    %1248 = vmatpush1.xpose.msra.mxu0 0.0
    %1249 = vmatprep.subr.mxu0 0.0
    %1250 = vmatpush1.xpose.msra.mxu0 0.0
    %1251 = vmatprep.subr.mxu0 0.0
    %1252 = vmatpush1.xpose.msra.mxu0 0.0
    %1253 = vmatprep.subr.mxu0 0.0
    %1254 = vmatpush1.xpose.msra.mxu0 0.0
    %1255 = vmatprep.subr.mxu0 0.0
    %1256 = vmatpush1.xpose.msra.mxu0 0.0
    %1257 = vmatprep.subr.mxu0 0.0
    %1258 = vmatpush1.xpose.msra.mxu0 0.0
    %1259 = vmatprep.subr.mxu0 0.0
    %1260 = vmatpush1.xpose.msra.mxu0 0.0
    %1261 = vmatprep.subr.mxu0 0.0
    %1262 = vmatpush1.xpose.msra.mxu0 0.0
    %1263 = vmatprep.subr.mxu0 0.0
    %1264 = vmatpush1.xpose.msra.mxu0 0.0
    %1265 = vmatprep.subr.mxu0 0.0
    %1266 = vmatpush1.xpose.msra.mxu0 0.0
    %1267 = vmatprep.subr.mxu0 0.0
    %1268 = vmatpush1.xpose.msra.mxu0 0.0
    %1269 = vmatprep.subr.mxu0 0.0
    %1270 = vmatpush1.xpose.msra.mxu0 0.0
    %1271 = vmatprep.subr.mxu0 0.0
    %1272 = vmatpush1.xpose.msra.mxu0 0.0
    %1273 = vmatprep.subr.mxu0 0.0
    %1274 = vmatpush1.xpose.msra.mxu0 0.0
    %1275 = vmatprep.subr.mxu0 0.0
    %1276 = vmatpush1.xpose.msra.mxu0 0.0
    %1277 = vmatprep.mubr.f32.mxu0 %v1086
    %1278 = vmatmul.mubr.f32.gmra.mrb[0].mxu0 %v1085
    %v1279 = vpop.f32.mrb[0].mxu0
    %v1280 = vadd.f32 0.0, %v1279
    %v1281 = vpop.f32.mrb[0].mxu0
    %1282 = vmatprep.mubr.f32.mxu0 %v1094
    %1283 = vmatmul.mubr.f32.gmra.mrb[0].mxu0 %v1093
    %v1284 = vpop.f32.mrb[0].mxu0
    %v1285 = vadd.f32 0.0, %v1284
    %v1286 = vpop.f32.mrb[0].mxu0
    %1287 = vmatprep.mubr.f32.mxu0 %v1102
    %1288 = vmatmul.mubr.f32.gmra.mrb[0].mxu0 %v1101
    %v1289 = vpop.f32.mrb[0].mxu0
    %v1290 = vadd.f32 0.0, %v1289
    %v1291 = vpop.f32.mrb[0].mxu0
    %1292 = vmatprep.mubr.f32.mxu0 %v1110
    %1293 = vmatmul.mubr.f32.gmra.mrb[0].mxu0 %v1109
    %v1294 = vpop.f32.mrb[0].mxu0
    %v1295 = vadd.f32 0.0, %v1294
    %v1296 = vpop.f32.mrb[0].mxu0
    %1297 = vdwg.mxu0
    %1298 = vmatprep.subr.mxu0 %v498
    %1299 = vmatpush1.xpose.msra.mxu0 %v496
    %1300 = vmatprep.subr.mxu0 0.0
    %1301 = vmatpush1.xpose.msra.mxu0 0.0
    %1302 = vmatprep.subr.mxu0 0.0
    %1303 = vmatpush1.xpose.msra.mxu0 0.0
    %1304 = vmatprep.subr.mxu0 0.0
    %1305 = vmatpush1.xpose.msra.mxu0 0.0
    %1306 = vmatprep.subr.mxu0 0.0
    %1307 = vmatpush1.xpose.msra.mxu0 0.0
    %1308 = vmatprep.subr.mxu0 0.0
    %1309 = vmatpush1.xpose.msra.mxu0 0.0
    %1310 = vmatprep.subr.mxu0 0.0
    %1311 = vmatpush1.xpose.msra.mxu0 0.0
    %1312 = vmatprep.subr.mxu0 0.0
    %1313 = vmatpush1.xpose.msra.mxu0 0.0
    %1314 = vmatprep.subr.mxu0 0.0
    %1315 = vmatpush1.xpose.msra.mxu0 0.0
    %1316 = vmatprep.subr.mxu0 0.0
    %1317 = vmatpush1.xpose.msra.mxu0 0.0
    %1318 = vmatprep.subr.mxu0 0.0
    %1319 = vmatpush1.xpose.msra.mxu0 0.0
    %1320 = vmatprep.subr.mxu0 0.0
    %1321 = vmatpush1.xpose.msra.mxu0 0.0
    %1322 = vmatprep.subr.mxu0 0.0
    %1323 = vmatpush1.xpose.msra.mxu0 0.0
    %1324 = vmatprep.subr.mxu0 0.0
    %1325 = vmatpush1.xpose.msra.mxu0 0.0
    %1326 = vmatprep.subr.mxu0 0.0
    %1327 = vmatpush1.xpose.msra.mxu0 0.0
    %1328 = vmatprep.subr.mxu0 0.0
    %1329 = vmatpush1.xpose.msra.mxu0 0.0
    %1330 = vmatprep.subr.mxu0 0.0
    %1331 = vmatpush1.xpose.msra.mxu0 0.0
    %1332 = vmatprep.subr.mxu0 0.0
    %1333 = vmatpush1.xpose.msra.mxu0 0.0
    %1334 = vmatprep.subr.mxu0 0.0
    %1335 = vmatpush1.xpose.msra.mxu0 0.0
    %1336 = vmatprep.subr.mxu0 0.0
    %1337 = vmatpush1.xpose.msra.mxu0 0.0
    %1338 = vmatprep.subr.mxu0 0.0
    %1339 = vmatpush1.xpose.msra.mxu0 0.0
    %1340 = vmatprep.subr.mxu0 0.0
    %1341 = vmatpush1.xpose.msra.mxu0 0.0
    %1342 = vmatprep.subr.mxu0 0.0
    %1343 = vmatpush1.xpose.msra.mxu0 0.0
    %1344 = vmatprep.subr.mxu0 0.0
    %1345 = vmatpush1.xpose.msra.mxu0 0.0
    %1346 = vmatprep.subr.mxu0 0.0
    %1347 = vmatpush1.xpose.msra.mxu0 0.0
    %1348 = vmatprep.subr.mxu0 0.0
    %1349 = vmatpush1.xpose.msra.mxu0 0.0
    %1350 = vmatprep.subr.mxu0 0.0
    %1351 = vmatpush1.xpose.msra.mxu0 0.0
    %1352 = vmatprep.subr.mxu0 0.0
    %1353 = vmatpush1.xpose.msra.mxu0 0.0
    %1354 = vmatprep.subr.mxu0 0.0
    %1355 = vmatpush1.xpose.msra.mxu0 0.0
    %1356 = vmatprep.subr.mxu0 0.0
    %1357 = vmatpush1.xpose.msra.mxu0 0.0
    %1358 = vmatprep.subr.mxu0 0.0
    %1359 = vmatpush1.xpose.msra.mxu0 0.0
    %1360 = vmatprep.subr.mxu0 0.0
    %1361 = vmatpush1.xpose.msra.mxu0 0.0
    %1362 = vmatprep.mubr.f32.mxu0 %v1088
    %1363 = vmatmul.mubr.f32.gmra.mrb[0].mxu0 %v1087
    %v1364 = vpop.f32.mrb[0].mxu0
    %v1365 = vadd.f32 %v1280, %v1364
    %v1366 = vpop.f32.mrb[0].mxu0
    %1367 = vmatprep.mubr.f32.mxu0 %v1096
    %1368 = vmatmul.mubr.f32.gmra.mrb[0].mxu0 %v1095
    %v1369 = vpop.f32.mrb[0].mxu0
    %v1370 = vadd.f32 %v1285, %v1369
    %v1371 = vpop.f32.mrb[0].mxu0
    %1372 = vmatprep.mubr.f32.mxu0 %v1104
    %1373 = vmatmul.mubr.f32.gmra.mrb[0].mxu0 %v1103
    %v1374 = vpop.f32.mrb[0].mxu0
    %v1375 = vadd.f32 %v1290, %v1374
    %v1376 = vpop.f32.mrb[0].mxu0
    %1377 = vmatprep.mubr.f32.mxu0 %v1112
    %1378 = vmatmul.mubr.f32.gmra.mrb[0].mxu0 %v1111
    %v1379 = vpop.f32.mrb[0].mxu0
    %v1380 = vadd.f32 %v1295, %v1379
    %v1381 = vpop.f32.mrb[0].mxu0
    %1382 = vdwg.mxu0
    %1383 = vmatprep.subr.mxu0 %v539
    %1384 = vmatpush1.xpose.msra.mxu0 %v537
    %1385 = vmatprep.subr.mxu0 0.0
    %1386 = vmatpush1.xpose.msra.mxu0 0.0
    %1387 = vmatprep.subr.mxu0 0.0
    %1388 = vmatpush1.xpose.msra.mxu0 0.0
    %1389 = vmatprep.subr.mxu0 0.0
    %1390 = vmatpush1.xpose.msra.mxu0 0.0
    %1391 = vmatprep.subr.mxu0 0.0
    %1392 = vmatpush1.xpose.msra.mxu0 0.0
    %1393 = vmatprep.subr.mxu0 0.0
    %1394 = vmatpush1.xpose.msra.mxu0 0.0
    %1395 = vmatprep.subr.mxu0 0.0
    %1396 = vmatpush1.xpose.msra.mxu0 0.0
    %1397 = vmatprep.subr.mxu0 0.0
    %1398 = vmatpush1.xpose.msra.mxu0 0.0
    %1399 = vmatprep.subr.mxu0 0.0
    %1400 = vmatpush1.xpose.msra.mxu0 0.0
    %1401 = vmatprep.subr.mxu0 0.0
    %1402 = vmatpush1.xpose.msra.mxu0 0.0
    %1403 = vmatprep.subr.mxu0 0.0
    %1404 = vmatpush1.xpose.msra.mxu0 0.0
    %1405 = vmatprep.subr.mxu0 0.0
    %1406 = vmatpush1.xpose.msra.mxu0 0.0
    %1407 = vmatprep.subr.mxu0 0.0
    %1408 = vmatpush1.xpose.msra.mxu0 0.0
    %1409 = vmatprep.subr.mxu0 0.0
    %1410 = vmatpush1.xpose.msra.mxu0 0.0
    %1411 = vmatprep.subr.mxu0 0.0
    %1412 = vmatpush1.xpose.msra.mxu0 0.0
    %1413 = vmatprep.subr.mxu0 0.0
    %1414 = vmatpush1.xpose.msra.mxu0 0.0
    %1415 = vmatprep.subr.mxu0 0.0
    %1416 = vmatpush1.xpose.msra.mxu0 0.0
    %1417 = vmatprep.subr.mxu0 0.0
    %1418 = vmatpush1.xpose.msra.mxu0 0.0
    %1419 = vmatprep.subr.mxu0 0.0
    %1420 = vmatpush1.xpose.msra.mxu0 0.0
    %1421 = vmatprep.subr.mxu0 0.0
    %1422 = vmatpush1.xpose.msra.mxu0 0.0
    %1423 = vmatprep.subr.mxu0 0.0
    %1424 = vmatpush1.xpose.msra.mxu0 0.0
    %1425 = vmatprep.subr.mxu0 0.0
    %1426 = vmatpush1.xpose.msra.mxu0 0.0
    %1427 = vmatprep.subr.mxu0 0.0
    %1428 = vmatpush1.xpose.msra.mxu0 0.0
    %1429 = vmatprep.subr.mxu0 0.0
    %1430 = vmatpush1.xpose.msra.mxu0 0.0
    %1431 = vmatprep.subr.mxu0 0.0
    %1432 = vmatpush1.xpose.msra.mxu0 0.0
    %1433 = vmatprep.subr.mxu0 0.0
    %1434 = vmatpush1.xpose.msra.mxu0 0.0
    %1435 = vmatprep.subr.mxu0 0.0
    %1436 = vmatpush1.xpose.msra.mxu0 0.0
    %1437 = vmatprep.subr.mxu0 0.0
    %1438 = vmatpush1.xpose.msra.mxu0 0.0
    %1439 = vmatprep.subr.mxu0 0.0
    %1440 = vmatpush1.xpose.msra.mxu0 0.0
    %1441 = vmatprep.subr.mxu0 0.0
    %1442 = vmatpush1.xpose.msra.mxu0 0.0
    %1443 = vmatprep.subr.mxu0 0.0
    %1444 = vmatpush1.xpose.msra.mxu0 0.0
    %1445 = vmatprep.subr.mxu0 0.0
    %1446 = vmatpush1.xpose.msra.mxu0 0.0
    %1447 = vmatprep.mubr.f32.mxu0 %v1090
    %1448 = vmatmul.mubr.f32.gmra.mrb[0].mxu0 %v1089
    %v1449 = vpop.f32.mrb[0].mxu0
    %v1450 = vadd.f32 %v1365, %v1449
    %v1451 = vpop.f32.mrb[0].mxu0
    %1452 = vmatprep.mubr.f32.mxu0 %v1098
    %1453 = vmatmul.mubr.f32.gmra.mrb[0].mxu0 %v1097
    %v1454 = vpop.f32.mrb[0].mxu0
    %v1455 = vadd.f32 %v1370, %v1454
    %v1456 = vpop.f32.mrb[0].mxu0
    %1457 = vmatprep.mubr.f32.mxu0 %v1106
    %1458 = vmatmul.mubr.f32.gmra.mrb[0].mxu0 %v1105
    %v1459 = vpop.f32.mrb[0].mxu0
    %v1460 = vadd.f32 %v1375, %v1459
    %v1461 = vpop.f32.mrb[0].mxu0
    %1462 = vmatprep.mubr.f32.mxu0 %v1114
    %1463 = vmatmul.mubr.f32.gmra.mrb[0].mxu0 %v1113
    %v1464 = vpop.f32.mrb[0].mxu0
    %v1465 = vadd.f32 %v1380, %v1464
    %v1466 = vpop.f32.mrb[0].mxu0
    %1467 = vdwg.mxu0
    %1468 = vmatprep.subr.mxu0 %v580
    %1469 = vmatpush1.xpose.msra.mxu0 %v578
    %1470 = vmatprep.subr.mxu0 0.0
    %1471 = vmatpush1.xpose.msra.mxu0 0.0
    %1472 = vmatprep.subr.mxu0 0.0
    %1473 = vmatpush1.xpose.msra.mxu0 0.0
    %1474 = vmatprep.subr.mxu0 0.0
    %1475 = vmatpush1.xpose.msra.mxu0 0.0
    %1476 = vmatprep.subr.mxu0 0.0
    %1477 = vmatpush1.xpose.msra.mxu0 0.0
    %1478 = vmatprep.subr.mxu0 0.0
    %1479 = vmatpush1.xpose.msra.mxu0 0.0
    %1480 = vmatprep.subr.mxu0 0.0
    %1481 = vmatpush1.xpose.msra.mxu0 0.0
    %1482 = vmatprep.subr.mxu0 0.0
    %1483 = vmatpush1.xpose.msra.mxu0 0.0
    %1484 = vmatprep.subr.mxu0 0.0
    %1485 = vmatpush1.xpose.msra.mxu0 0.0
    %1486 = vmatprep.subr.mxu0 0.0
    %1487 = vmatpush1.xpose.msra.mxu0 0.0
    %1488 = vmatprep.subr.mxu0 0.0
    %1489 = vmatpush1.xpose.msra.mxu0 0.0
    %1490 = vmatprep.subr.mxu0 0.0
    %1491 = vmatpush1.xpose.msra.mxu0 0.0
    %1492 = vmatprep.subr.mxu0 0.0
    %1493 = vmatpush1.xpose.msra.mxu0 0.0
    %1494 = vmatprep.subr.mxu0 0.0
    %1495 = vmatpush1.xpose.msra.mxu0 0.0
    %1496 = vmatprep.subr.mxu0 0.0
    %1497 = vmatpush1.xpose.msra.mxu0 0.0
    %1498 = vmatprep.subr.mxu0 0.0
    %1499 = vmatpush1.xpose.msra.mxu0 0.0
    %1500 = vmatprep.subr.mxu0 0.0
    %1501 = vmatpush1.xpose.msra.mxu0 0.0
    %1502 = vmatprep.subr.mxu0 0.0
    %1503 = vmatpush1.xpose.msra.mxu0 0.0
    %1504 = vmatprep.subr.mxu0 0.0
    %1505 = vmatpush1.xpose.msra.mxu0 0.0
    %1506 = vmatprep.subr.mxu0 0.0
    %1507 = vmatpush1.xpose.msra.mxu0 0.0
    %1508 = vmatprep.subr.mxu0 0.0
    %1509 = vmatpush1.xpose.msra.mxu0 0.0
    %1510 = vmatprep.subr.mxu0 0.0
    %1511 = vmatpush1.xpose.msra.mxu0 0.0
    %1512 = vmatprep.subr.mxu0 0.0
    %1513 = vmatpush1.xpose.msra.mxu0 0.0
    %1514 = vmatprep.subr.mxu0 0.0
    %1515 = vmatpush1.xpose.msra.mxu0 0.0
    %1516 = vmatprep.subr.mxu0 0.0
    %1517 = vmatpush1.xpose.msra.mxu0 0.0
    %1518 = vmatprep.subr.mxu0 0.0
    %1519 = vmatpush1.xpose.msra.mxu0 0.0
    %1520 = vmatprep.subr.mxu0 0.0
    %1521 = vmatpush1.xpose.msra.mxu0 0.0
    %1522 = vmatprep.subr.mxu0 0.0
    %1523 = vmatpush1.xpose.msra.mxu0 0.0
    %1524 = vmatprep.subr.mxu0 0.0
    %1525 = vmatpush1.xpose.msra.mxu0 0.0
    %1526 = vmatprep.subr.mxu0 0.0
    %1527 = vmatpush1.xpose.msra.mxu0 0.0
    %1528 = vmatprep.subr.mxu0 0.0
    %1529 = vmatpush1.xpose.msra.mxu0 0.0
    %1530 = vmatprep.subr.mxu0 0.0
    %1531 = vmatpush1.xpose.msra.mxu0 0.0
    %1532 = vmatprep.mubr.f32.mxu0 %v1092
    %1533 = vmatmul.mubr.f32.gmra.mrb[0].mxu0 %v1091
    %v1534 = vpop.f32.mrb[0].mxu0
    %v1535 = vadd.f32 %v1450, %v1534
    %v1536 = vpop.f32.mrb[0].mxu0
    %1537 = vmatprep.mubr.f32.mxu0 %v1100
    %1538 = vmatmul.mubr.f32.gmra.mrb[0].mxu0 %v1099
    %v1539 = vpop.f32.mrb[0].mxu0
    %v1540 = vadd.f32 %v1455, %v1539
    %v1541 = vpop.f32.mrb[0].mxu0
    %1542 = vmatprep.mubr.f32.mxu0 %v1108
    %1543 = vmatmul.mubr.f32.gmra.mrb[0].mxu0 %v1107
    %v1544 = vpop.f32.mrb[0].mxu0
    %v1545 = vadd.f32 %v1460, %v1544
    %v1546 = vpop.f32.mrb[0].mxu0
    %1547 = vmatprep.mubr.f32.mxu0 %v1116
    %1548 = vmatmul.mubr.f32.gmra.mrb[0].mxu0 %v1115
    %v1549 = vpop.f32.mrb[0].mxu0
    %v1550 = vadd.f32 %v1465, %v1549
    %v1551 = vpop.f32.mrb[0].mxu0
    %1552 = vdwg.mxu0
    %1553 = vmatprep.subr.mxu0 %v624
    %1554 = vmatpush1.xpose.msra.mxu0 %v622
    %1555 = vmatprep.subr.mxu0 0.0
    %1556 = vmatpush1.xpose.msra.mxu0 0.0
    %1557 = vmatprep.subr.mxu0 0.0
    %1558 = vmatpush1.xpose.msra.mxu0 0.0
    %1559 = vmatprep.subr.mxu0 0.0
    %1560 = vmatpush1.xpose.msra.mxu0 0.0
    %1561 = vmatprep.subr.mxu0 0.0
    %1562 = vmatpush1.xpose.msra.mxu0 0.0
    %1563 = vmatprep.subr.mxu0 0.0
    %1564 = vmatpush1.xpose.msra.mxu0 0.0
    %1565 = vmatprep.subr.mxu0 0.0
    %1566 = vmatpush1.xpose.msra.mxu0 0.0
    %1567 = vmatprep.subr.mxu0 0.0
    %1568 = vmatpush1.xpose.msra.mxu0 0.0
    %1569 = vmatprep.subr.mxu0 0.0
    %1570 = vmatpush1.xpose.msra.mxu0 0.0
    %1571 = vmatprep.subr.mxu0 0.0
    %1572 = vmatpush1.xpose.msra.mxu0 0.0
    %1573 = vmatprep.subr.mxu0 0.0
    %1574 = vmatpush1.xpose.msra.mxu0 0.0
    %1575 = vmatprep.subr.mxu0 0.0
    %1576 = vmatpush1.xpose.msra.mxu0 0.0
    %1577 = vmatprep.subr.mxu0 0.0
    %1578 = vmatpush1.xpose.msra.mxu0 0.0
    %1579 = vmatprep.subr.mxu0 0.0
    %1580 = vmatpush1.xpose.msra.mxu0 0.0
    %1581 = vmatprep.subr.mxu0 0.0
    %1582 = vmatpush1.xpose.msra.mxu0 0.0
    %1583 = vmatprep.subr.mxu0 0.0
    %1584 = vmatpush1.xpose.msra.mxu0 0.0
    %1585 = vmatprep.subr.mxu0 0.0
    %1586 = vmatpush1.xpose.msra.mxu0 0.0
    %1587 = vmatprep.subr.mxu0 0.0
    %1588 = vmatpush1.xpose.msra.mxu0 0.0
    %1589 = vmatprep.subr.mxu0 0.0
    %1590 = vmatpush1.xpose.msra.mxu0 0.0
    %1591 = vmatprep.subr.mxu0 0.0
    %1592 = vmatpush1.xpose.msra.mxu0 0.0
    %1593 = vmatprep.subr.mxu0 0.0
    %1594 = vmatpush1.xpose.msra.mxu0 0.0
    %1595 = vmatprep.subr.mxu0 0.0
    %1596 = vmatpush1.xpose.msra.mxu0 0.0
    %1597 = vmatprep.subr.mxu0 0.0
    %1598 = vmatpush1.xpose.msra.mxu0 0.0
    %1599 = vmatprep.subr.mxu0 0.0
    %1600 = vmatpush1.xpose.msra.mxu0 0.0
    %1601 = vmatprep.subr.mxu0 0.0
    %1602 = vmatpush1.xpose.msra.mxu0 0.0
    %1603 = vmatprep.subr.mxu0 0.0
    %1604 = vmatpush1.xpose.msra.mxu0 0.0
    %1605 = vmatprep.subr.mxu0 0.0
    %1606 = vmatpush1.xpose.msra.mxu0 0.0
    %1607 = vmatprep.subr.mxu0 0.0
    %1608 = vmatpush1.xpose.msra.mxu0 0.0
    %1609 = vmatprep.subr.mxu0 0.0
    %1610 = vmatpush1.xpose.msra.mxu0 0.0
    %1611 = vmatprep.subr.mxu0 0.0
    %1612 = vmatpush1.xpose.msra.mxu0 0.0
    %1613 = vmatprep.subr.mxu0 0.0
    %1614 = vmatpush1.xpose.msra.mxu0 0.0
    %1615 = vmatprep.subr.mxu0 0.0
    %1616 = vmatpush1.xpose.msra.mxu0 0.0
    %1617 = vmatprep.mubr.f32.mxu0 %v1118
    %1618 = vmatmul.mubr.f32.gmra.mrb[0].mxu0 %v1117
    %v1619 = vpop.f32.mrb[0].mxu0
    %v1620 = vadd.f32 0.0, %v1619
    %v1621 = vpop.f32.mrb[0].mxu0
    %1622 = vmatprep.mubr.f32.mxu0 %v1126
    %1623 = vmatmul.mubr.f32.gmra.mrb[0].mxu0 %v1125
    %v1624 = vpop.f32.mrb[0].mxu0
    %v1625 = vadd.f32 0.0, %v1624
    %v1626 = vpop.f32.mrb[0].mxu0
    %1627 = vmatprep.mubr.f32.mxu0 %v1134
    %1628 = vmatmul.mubr.f32.gmra.mrb[0].mxu0 %v1133
    %v1629 = vpop.f32.mrb[0].mxu0
    %v1630 = vadd.f32 0.0, %v1629
    %v1631 = vpop.f32.mrb[0].mxu0
    %1632 = vmatprep.mubr.f32.mxu0 %v1142
    %1633 = vmatmul.mubr.f32.gmra.mrb[0].mxu0 %v1141
    %v1634 = vpop.f32.mrb[0].mxu0
    %v1635 = vadd.f32 0.0, %v1634
    %v1636 = vpop.f32.mrb[0].mxu0
    %1637 = vdwg.mxu0
    %1638 = vmatprep.subr.mxu0 %v665
    %1639 = vmatpush1.xpose.msra.mxu0 %v663
    %1640 = vmatprep.subr.mxu0 0.0
    %1641 = vmatpush1.xpose.msra.mxu0 0.0
    %1642 = vmatprep.subr.mxu0 0.0
    %1643 = vmatpush1.xpose.msra.mxu0 0.0
    %1644 = vmatprep.subr.mxu0 0.0
    %1645 = vmatpush1.xpose.msra.mxu0 0.0
    %1646 = vmatprep.subr.mxu0 0.0
    %1647 = vmatpush1.xpose.msra.mxu0 0.0
    %1648 = vmatprep.subr.mxu0 0.0
    %1649 = vmatpush1.xpose.msra.mxu0 0.0
    %1650 = vmatprep.subr.mxu0 0.0
    %1651 = vmatpush1.xpose.msra.mxu0 0.0
    %1652 = vmatprep.subr.mxu0 0.0
    %1653 = vmatpush1.xpose.msra.mxu0 0.0
    %1654 = vmatprep.subr.mxu0 0.0
    %1655 = vmatpush1.xpose.msra.mxu0 0.0
    %1656 = vmatprep.subr.mxu0 0.0
    %1657 = vmatpush1.xpose.msra.mxu0 0.0
    %1658 = vmatprep.subr.mxu0 0.0
    %1659 = vmatpush1.xpose.msra.mxu0 0.0
    %1660 = vmatprep.subr.mxu0 0.0
    %1661 = vmatpush1.xpose.msra.mxu0 0.0
    %1662 = vmatprep.subr.mxu0 0.0
    %1663 = vmatpush1.xpose.msra.mxu0 0.0
    %1664 = vmatprep.subr.mxu0 0.0
    %1665 = vmatpush1.xpose.msra.mxu0 0.0
    %1666 = vmatprep.subr.mxu0 0.0
    %1667 = vmatpush1.xpose.msra.mxu0 0.0
    %1668 = vmatprep.subr.mxu0 0.0
    %1669 = vmatpush1.xpose.msra.mxu0 0.0
    %1670 = vmatprep.subr.mxu0 0.0
    %1671 = vmatpush1.xpose.msra.mxu0 0.0
    %1672 = vmatprep.subr.mxu0 0.0
    %1673 = vmatpush1.xpose.msra.mxu0 0.0
    %1674 = vmatprep.subr.mxu0 0.0
    %1675 = vmatpush1.xpose.msra.mxu0 0.0
    %1676 = vmatprep.subr.mxu0 0.0
    %1677 = vmatpush1.xpose.msra.mxu0 0.0
    %1678 = vmatprep.subr.mxu0 0.0
    %1679 = vmatpush1.xpose.msra.mxu0 0.0
    %1680 = vmatprep.subr.mxu0 0.0
    %1681 = vmatpush1.xpose.msra.mxu0 0.0
    %1682 = vmatprep.subr.mxu0 0.0
    %1683 = vmatpush1.xpose.msra.mxu0 0.0
    %1684 = vmatprep.subr.mxu0 0.0
    %1685 = vmatpush1.xpose.msra.mxu0 0.0
    %1686 = vmatprep.subr.mxu0 0.0
    %1687 = vmatpush1.xpose.msra.mxu0 0.0
    %1688 = vmatprep.subr.mxu0 0.0
    %1689 = vmatpush1.xpose.msra.mxu0 0.0
    %1690 = vmatprep.subr.mxu0 0.0
    %1691 = vmatpush1.xpose.msra.mxu0 0.0
    %1692 = vmatprep.subr.mxu0 0.0
    %1693 = vmatpush1.xpose.msra.mxu0 0.0
    %1694 = vmatprep.subr.mxu0 0.0
    %1695 = vmatpush1.xpose.msra.mxu0 0.0
    %1696 = vmatprep.subr.mxu0 0.0
    %1697 = vmatpush1.xpose.msra.mxu0 0.0
    %1698 = vmatprep.subr.mxu0 0.0
    %1699 = vmatpush1.xpose.msra.mxu0 0.0
    %1700 = vmatprep.subr.mxu0 0.0
    %1701 = vmatpush1.xpose.msra.mxu0 0.0
    %1702 = vmatprep.mubr.f32.mxu0 %v1120
    %1703 = vmatmul.mubr.f32.gmra.mrb[0].mxu0 %v1119
    %v1704 = vpop.f32.mrb[0].mxu0
    %v1705 = vadd.f32 %v1620, %v1704
    %v1706 = vpop.f32.mrb[0].mxu0
    %1707 = vmatprep.mubr.f32.mxu0 %v1128
    %1708 = vmatmul.mubr.f32.gmra.mrb[0].mxu0 %v1127
    %v1709 = vpop.f32.mrb[0].mxu0
    %v1710 = vadd.f32 %v1625, %v1709
    %v1711 = vpop.f32.mrb[0].mxu0
    %1712 = vmatprep.mubr.f32.mxu0 %v1136
    %1713 = vmatmul.mubr.f32.gmra.mrb[0].mxu0 %v1135
    %v1714 = vpop.f32.mrb[0].mxu0
    %v1715 = vadd.f32 %v1630, %v1714
    %v1716 = vpop.f32.mrb[0].mxu0
    %1717 = vmatprep.mubr.f32.mxu0 %v1144
    %1718 = vmatmul.mubr.f32.gmra.mrb[0].mxu0 %v1143
    %v1719 = vpop.f32.mrb[0].mxu0
    %v1720 = vadd.f32 %v1635, %v1719
    %v1721 = vpop.f32.mrb[0].mxu0
    %1722 = vdwg.mxu0
    %1723 = vmatprep.subr.mxu0 %v706
    %1724 = vmatpush1.xpose.msra.mxu0 %v704
    %1725 = vmatprep.subr.mxu0 0.0
    %1726 = vmatpush1.xpose.msra.mxu0 0.0
    %1727 = vmatprep.subr.mxu0 0.0
    %1728 = vmatpush1.xpose.msra.mxu0 0.0
    %1729 = vmatprep.subr.mxu0 0.0
    %1730 = vmatpush1.xpose.msra.mxu0 0.0
    %1731 = vmatprep.subr.mxu0 0.0
    %1732 = vmatpush1.xpose.msra.mxu0 0.0
    %1733 = vmatprep.subr.mxu0 0.0
    %1734 = vmatpush1.xpose.msra.mxu0 0.0
    %1735 = vmatprep.subr.mxu0 0.0
    %1736 = vmatpush1.xpose.msra.mxu0 0.0
    %1737 = vmatprep.subr.mxu0 0.0
    %1738 = vmatpush1.xpose.msra.mxu0 0.0
    %1739 = vmatprep.subr.mxu0 0.0
    %1740 = vmatpush1.xpose.msra.mxu0 0.0
    %1741 = vmatprep.subr.mxu0 0.0
    %1742 = vmatpush1.xpose.msra.mxu0 0.0
    %1743 = vmatprep.subr.mxu0 0.0
    %1744 = vmatpush1.xpose.msra.mxu0 0.0
    %1745 = vmatprep.subr.mxu0 0.0
    %1746 = vmatpush1.xpose.msra.mxu0 0.0
    %1747 = vmatprep.subr.mxu0 0.0
    %1748 = vmatpush1.xpose.msra.mxu0 0.0
    %1749 = vmatprep.subr.mxu0 0.0
    %1750 = vmatpush1.xpose.msra.mxu0 0.0
    %1751 = vmatprep.subr.mxu0 0.0
    %1752 = vmatpush1.xpose.msra.mxu0 0.0
    %1753 = vmatprep.subr.mxu0 0.0
    %1754 = vmatpush1.xpose.msra.mxu0 0.0
    %1755 = vmatprep.subr.mxu0 0.0
    %1756 = vmatpush1.xpose.msra.mxu0 0.0
    %1757 = vmatprep.subr.mxu0 0.0
    %1758 = vmatpush1.xpose.msra.mxu0 0.0
    %1759 = vmatprep.subr.mxu0 0.0
    %1760 = vmatpush1.xpose.msra.mxu0 0.0
    %1761 = vmatprep.subr.mxu0 0.0
    %1762 = vmatpush1.xpose.msra.mxu0 0.0
    %1763 = vmatprep.subr.mxu0 0.0
    %1764 = vmatpush1.xpose.msra.mxu0 0.0
    %1765 = vmatprep.subr.mxu0 0.0
    %1766 = vmatpush1.xpose.msra.mxu0 0.0
    %1767 = vmatprep.subr.mxu0 0.0
    %1768 = vmatpush1.xpose.msra.mxu0 0.0
    %1769 = vmatprep.subr.mxu0 0.0
    %1770 = vmatpush1.xpose.msra.mxu0 0.0
    %1771 = vmatprep.subr.mxu0 0.0
    %1772 = vmatpush1.xpose.msra.mxu0 0.0
    %1773 = vmatprep.subr.mxu0 0.0
    %1774 = vmatpush1.xpose.msra.mxu0 0.0
    %1775 = vmatprep.subr.mxu0 0.0
    %1776 = vmatpush1.xpose.msra.mxu0 0.0
    %1777 = vmatprep.subr.mxu0 0.0
    %1778 = vmatpush1.xpose.msra.mxu0 0.0
    %1779 = vmatprep.subr.mxu0 0.0
    %1780 = vmatpush1.xpose.msra.mxu0 0.0
    %1781 = vmatprep.subr.mxu0 0.0
    %1782 = vmatpush1.xpose.msra.mxu0 0.0
    %1783 = vmatprep.subr.mxu0 0.0
    %1784 = vmatpush1.xpose.msra.mxu0 0.0
    %1785 = vmatprep.subr.mxu0 0.0
    %1786 = vmatpush1.xpose.msra.mxu0 0.0
    %1787 = vmatprep.mubr.f32.mxu0 %v1122
    %1788 = vmatmul.mubr.f32.gmra.mrb[0].mxu0 %v1121
    %v1789 = vpop.f32.mrb[0].mxu0
    %v1790 = vadd.f32 %v1705, %v1789
    %v1791 = vpop.f32.mrb[0].mxu0
    %1792 = vmatprep.mubr.f32.mxu0 %v1130
    %1793 = vmatmul.mubr.f32.gmra.mrb[0].mxu0 %v1129
    %v1794 = vpop.f32.mrb[0].mxu0
    %v1795 = vadd.f32 %v1710, %v1794
    %v1796 = vpop.f32.mrb[0].mxu0
    %1797 = vmatprep.mubr.f32.mxu0 %v1138
    %1798 = vmatmul.mubr.f32.gmra.mrb[0].mxu0 %v1137
    %v1799 = vpop.f32.mrb[0].mxu0
    %v1800 = vadd.f32 %v1715, %v1799
    %v1801 = vpop.f32.mrb[0].mxu0
    %1802 = vmatprep.mubr.f32.mxu0 %v1146
    %1803 = vmatmul.mubr.f32.gmra.mrb[0].mxu0 %v1145
    %v1804 = vpop.f32.mrb[0].mxu0
    %v1805 = vadd.f32 %v1720, %v1804
    %v1806 = vpop.f32.mrb[0].mxu0
    %1807 = vdwg.mxu0
    %1808 = vmatprep.subr.mxu0 %v747
    %1809 = vmatpush1.xpose.msra.mxu0 %v745
    %1810 = vmatprep.subr.mxu0 0.0
    %1811 = vmatpush1.xpose.msra.mxu0 0.0
    %1812 = vmatprep.subr.mxu0 0.0
    %1813 = vmatpush1.xpose.msra.mxu0 0.0
    %1814 = vmatprep.subr.mxu0 0.0
    %1815 = vmatpush1.xpose.msra.mxu0 0.0
    %1816 = vmatprep.subr.mxu0 0.0
    %1817 = vmatpush1.xpose.msra.mxu0 0.0
    %1818 = vmatprep.subr.mxu0 0.0
    %1819 = vmatpush1.xpose.msra.mxu0 0.0
    %1820 = vmatprep.subr.mxu0 0.0
    %1821 = vmatpush1.xpose.msra.mxu0 0.0
    %1822 = vmatprep.subr.mxu0 0.0
    %1823 = vmatpush1.xpose.msra.mxu0 0.0
    %1824 = vmatprep.subr.mxu0 0.0
    %1825 = vmatpush1.xpose.msra.mxu0 0.0
    %1826 = vmatprep.subr.mxu0 0.0
    %1827 = vmatpush1.xpose.msra.mxu0 0.0
    %1828 = vmatprep.subr.mxu0 0.0
    %1829 = vmatpush1.xpose.msra.mxu0 0.0
    %1830 = vmatprep.subr.mxu0 0.0
    %1831 = vmatpush1.xpose.msra.mxu0 0.0
    %1832 = vmatprep.subr.mxu0 0.0
    %1833 = vmatpush1.xpose.msra.mxu0 0.0
    %1834 = vmatprep.subr.mxu0 0.0
    %1835 = vmatpush1.xpose.msra.mxu0 0.0
    %1836 = vmatprep.subr.mxu0 0.0
    %1837 = vmatpush1.xpose.msra.mxu0 0.0
    %1838 = vmatprep.subr.mxu0 0.0
    %1839 = vmatpush1.xpose.msra.mxu0 0.0
    %1840 = vmatprep.subr.mxu0 0.0
    %1841 = vmatpush1.xpose.msra.mxu0 0.0
    %1842 = vmatprep.subr.mxu0 0.0
    %1843 = vmatpush1.xpose.msra.mxu0 0.0
    %1844 = vmatprep.subr.mxu0 0.0
    %1845 = vmatpush1.xpose.msra.mxu0 0.0
    %1846 = vmatprep.subr.mxu0 0.0
    %1847 = vmatpush1.xpose.msra.mxu0 0.0
    %1848 = vmatprep.subr.mxu0 0.0
    %1849 = vmatpush1.xpose.msra.mxu0 0.0
    %1850 = vmatprep.subr.mxu0 0.0
    %1851 = vmatpush1.xpose.msra.mxu0 0.0
    %1852 = vmatprep.subr.mxu0 0.0
    %1853 = vmatpush1.xpose.msra.mxu0 0.0
    %1854 = vmatprep.subr.mxu0 0.0
    %1855 = vmatpush1.xpose.msra.mxu0 0.0
    %1856 = vmatprep.subr.mxu0 0.0
    %1857 = vmatpush1.xpose.msra.mxu0 0.0
    %1858 = vmatprep.subr.mxu0 0.0
    %1859 = vmatpush1.xpose.msra.mxu0 0.0
    %1860 = vmatprep.subr.mxu0 0.0
    %1861 = vmatpush1.xpose.msra.mxu0 0.0
    %1862 = vmatprep.subr.mxu0 0.0
    %1863 = vmatpush1.xpose.msra.mxu0 0.0
    %1864 = vmatprep.subr.mxu0 0.0
    %1865 = vmatpush1.xpose.msra.mxu0 0.0
    %1866 = vmatprep.subr.mxu0 0.0
    %1867 = vmatpush1.xpose.msra.mxu0 0.0
    %1868 = vmatprep.subr.mxu0 0.0
    %1869 = vmatpush1.xpose.msra.mxu0 0.0
    %1870 = vmatprep.subr.mxu0 0.0
    %1871 = vmatpush1.xpose.msra.mxu0 0.0
    %1872 = vmatprep.mubr.f32.mxu0 %v1124
    %1873 = vmatmul.mubr.f32.gmra.mrb[0].mxu0 %v1123
    %v1874 = vpop.f32.mrb[0].mxu0
    %v1875 = vadd.f32 %v1790, %v1874
    %v1876 = vpop.f32.mrb[0].mxu0
    %1877 = vmatprep.mubr.f32.mxu0 %v1132
    %1878 = vmatmul.mubr.f32.gmra.mrb[0].mxu0 %v1131
    %v1879 = vpop.f32.mrb[0].mxu0
    %v1880 = vadd.f32 %v1795, %v1879
    %v1881 = vpop.f32.mrb[0].mxu0
    %1882 = vmatprep.mubr.f32.mxu0 %v1140
    %1883 = vmatmul.mubr.f32.gmra.mrb[0].mxu0 %v1139
    %v1884 = vpop.f32.mrb[0].mxu0
    %v1885 = vadd.f32 %v1800, %v1884
    %v1886 = vpop.f32.mrb[0].mxu0
    %1887 = vmatprep.mubr.f32.mxu0 %v1148
    %1888 = vmatmul.mubr.f32.gmra.mrb[0].mxu0 %v1147
    %v1889 = vpop.f32.mrb[0].mxu0
    %v1890 = vadd.f32 %v1805, %v1889
    %v1891 = vpop.f32.mrb[0].mxu0
    %1892 = vdwg.mxu0
    %1893 = vmatprep.subr.mxu0 %v791
    %1894 = vmatpush1.xpose.msra.mxu0 %v789
    %1895 = vmatprep.subr.mxu0 0.0
    %1896 = vmatpush1.xpose.msra.mxu0 0.0
    %1897 = vmatprep.subr.mxu0 0.0
    %1898 = vmatpush1.xpose.msra.mxu0 0.0
    %1899 = vmatprep.subr.mxu0 0.0
    %1900 = vmatpush1.xpose.msra.mxu0 0.0
    %1901 = vmatprep.subr.mxu0 0.0
    %1902 = vmatpush1.xpose.msra.mxu0 0.0
    %1903 = vmatprep.subr.mxu0 0.0
    %1904 = vmatpush1.xpose.msra.mxu0 0.0
    %1905 = vmatprep.subr.mxu0 0.0
    %1906 = vmatpush1.xpose.msra.mxu0 0.0
    %1907 = vmatprep.subr.mxu0 0.0
    %1908 = vmatpush1.xpose.msra.mxu0 0.0
    %1909 = vmatprep.subr.mxu0 0.0
    %1910 = vmatpush1.xpose.msra.mxu0 0.0
    %1911 = vmatprep.subr.mxu0 0.0
    %1912 = vmatpush1.xpose.msra.mxu0 0.0
    %1913 = vmatprep.subr.mxu0 0.0
    %1914 = vmatpush1.xpose.msra.mxu0 0.0
    %1915 = vmatprep.subr.mxu0 0.0
    %1916 = vmatpush1.xpose.msra.mxu0 0.0
    %1917 = vmatprep.subr.mxu0 0.0
    %1918 = vmatpush1.xpose.msra.mxu0 0.0
    %1919 = vmatprep.subr.mxu0 0.0
    %1920 = vmatpush1.xpose.msra.mxu0 0.0
    %1921 = vmatprep.subr.mxu0 0.0
    %1922 = vmatpush1.xpose.msra.mxu0 0.0
    %1923 = vmatprep.subr.mxu0 0.0
    %1924 = vmatpush1.xpose.msra.mxu0 0.0
    %1925 = vmatprep.subr.mxu0 0.0
    %1926 = vmatpush1.xpose.msra.mxu0 0.0
    %1927 = vmatprep.subr.mxu0 0.0
    %1928 = vmatpush1.xpose.msra.mxu0 0.0
    %1929 = vmatprep.subr.mxu0 0.0
    %1930 = vmatpush1.xpose.msra.mxu0 0.0
    %1931 = vmatprep.subr.mxu0 0.0
    %1932 = vmatpush1.xpose.msra.mxu0 0.0
    %1933 = vmatprep.subr.mxu0 0.0
    %1934 = vmatpush1.xpose.msra.mxu0 0.0
    %1935 = vmatprep.subr.mxu0 0.0
    %1936 = vmatpush1.xpose.msra.mxu0 0.0
    %1937 = vmatprep.subr.mxu0 0.0
    %1938 = vmatpush1.xpose.msra.mxu0 0.0
    %1939 = vmatprep.subr.mxu0 0.0
    %1940 = vmatpush1.xpose.msra.mxu0 0.0
    %1941 = vmatprep.subr.mxu0 0.0
    %1942 = vmatpush1.xpose.msra.mxu0 0.0
    %1943 = vmatprep.subr.mxu0 0.0
    %1944 = vmatpush1.xpose.msra.mxu0 0.0
    %1945 = vmatprep.subr.mxu0 0.0
    %1946 = vmatpush1.xpose.msra.mxu0 0.0
    %1947 = vmatprep.subr.mxu0 0.0
    %1948 = vmatpush1.xpose.msra.mxu0 0.0
    %1949 = vmatprep.subr.mxu0 0.0
    %1950 = vmatpush1.xpose.msra.mxu0 0.0
    %1951 = vmatprep.subr.mxu0 0.0
    %1952 = vmatpush1.xpose.msra.mxu0 0.0
    %1953 = vmatprep.subr.mxu0 0.0
    %1954 = vmatpush1.xpose.msra.mxu0 0.0
    %1955 = vmatprep.subr.mxu0 0.0
    %1956 = vmatpush1.xpose.msra.mxu0 0.0
    %1957 = vmatprep.mubr.f32.mxu0 %v1150
    %1958 = vmatmul.mubr.f32.gmra.mrb[0].mxu0 %v1149
    %v1959 = vpop.f32.mrb[0].mxu0
    %v1960 = vadd.f32 0.0, %v1959
    %v1961 = vpop.f32.mrb[0].mxu0
    %1962 = vmatprep.mubr.f32.mxu0 %v1158
    %1963 = vmatmul.mubr.f32.gmra.mrb[0].mxu0 %v1157
    %v1964 = vpop.f32.mrb[0].mxu0
    %v1965 = vadd.f32 0.0, %v1964
    %v1966 = vpop.f32.mrb[0].mxu0
    %1967 = vmatprep.mubr.f32.mxu0 %v1166
    %1968 = vmatmul.mubr.f32.gmra.mrb[0].mxu0 %v1165
    %v1969 = vpop.f32.mrb[0].mxu0
    %v1970 = vadd.f32 0.0, %v1969
    %v1971 = vpop.f32.mrb[0].mxu0
    %1972 = vmatprep.mubr.f32.mxu0 %v1174
    %1973 = vmatmul.mubr.f32.gmra.mrb[0].mxu0 %v1173
    %v1974 = vpop.f32.mrb[0].mxu0
    %v1975 = vadd.f32 0.0, %v1974
    %v1976 = vpop.f32.mrb[0].mxu0
    %1977 = vdwg.mxu0
    %1978 = vmatprep.subr.mxu0 %v832
    %1979 = vmatpush1.xpose.msra.mxu0 %v830
    %1980 = vmatprep.subr.mxu0 0.0
    %1981 = vmatpush1.xpose.msra.mxu0 0.0
    %1982 = vmatprep.subr.mxu0 0.0
    %1983 = vmatpush1.xpose.msra.mxu0 0.0
    %1984 = vmatprep.subr.mxu0 0.0
    %1985 = vmatpush1.xpose.msra.mxu0 0.0
    %1986 = vmatprep.subr.mxu0 0.0
    %1987 = vmatpush1.xpose.msra.mxu0 0.0
    %1988 = vmatprep.subr.mxu0 0.0
    %1989 = vmatpush1.xpose.msra.mxu0 0.0
    %1990 = vmatprep.subr.mxu0 0.0
    %1991 = vmatpush1.xpose.msra.mxu0 0.0
    %1992 = vmatprep.subr.mxu0 0.0
    %1993 = vmatpush1.xpose.msra.mxu0 0.0
    %1994 = vmatprep.subr.mxu0 0.0
    %1995 = vmatpush1.xpose.msra.mxu0 0.0
    %1996 = vmatprep.subr.mxu0 0.0
    %1997 = vmatpush1.xpose.msra.mxu0 0.0
    %1998 = vmatprep.subr.mxu0 0.0
    %1999 = vmatpush1.xpose.msra.mxu0 0.0
    %2000 = vmatprep.subr.mxu0 0.0
    %2001 = vmatpush1.xpose.msra.mxu0 0.0
    %2002 = vmatprep.subr.mxu0 0.0
    %2003 = vmatpush1.xpose.msra.mxu0 0.0
    %2004 = vmatprep.subr.mxu0 0.0
    %2005 = vmatpush1.xpose.msra.mxu0 0.0
    %2006 = vmatprep.subr.mxu0 0.0
    %2007 = vmatpush1.xpose.msra.mxu0 0.0
    %2008 = vmatprep.subr.mxu0 0.0
    %2009 = vmatpush1.xpose.msra.mxu0 0.0
    %2010 = vmatprep.subr.mxu0 0.0
    %2011 = vmatpush1.xpose.msra.mxu0 0.0
    %2012 = vmatprep.subr.mxu0 0.0
    %2013 = vmatpush1.xpose.msra.mxu0 0.0
    %2014 = vmatprep.subr.mxu0 0.0
    %2015 = vmatpush1.xpose.msra.mxu0 0.0
    %2016 = vmatprep.subr.mxu0 0.0
    %2017 = vmatpush1.xpose.msra.mxu0 0.0
    %2018 = vmatprep.subr.mxu0 0.0
    %2019 = vmatpush1.xpose.msra.mxu0 0.0
    %2020 = vmatprep.subr.mxu0 0.0
    %2021 = vmatpush1.xpose.msra.mxu0 0.0
    %2022 = vmatprep.subr.mxu0 0.0
    %2023 = vmatpush1.xpose.msra.mxu0 0.0
    %2024 = vmatprep.subr.mxu0 0.0
    %2025 = vmatpush1.xpose.msra.mxu0 0.0
    %2026 = vmatprep.subr.mxu0 0.0
    %2027 = vmatpush1.xpose.msra.mxu0 0.0
    %2028 = vmatprep.subr.mxu0 0.0
    %2029 = vmatpush1.xpose.msra.mxu0 0.0
    %2030 = vmatprep.subr.mxu0 0.0
    %2031 = vmatpush1.xpose.msra.mxu0 0.0
    %2032 = vmatprep.subr.mxu0 0.0
    %2033 = vmatpush1.xpose.msra.mxu0 0.0
    %2034 = vmatprep.subr.mxu0 0.0
    %2035 = vmatpush1.xpose.msra.mxu0 0.0
    %2036 = vmatprep.subr.mxu0 0.0
    %2037 = vmatpush1.xpose.msra.mxu0 0.0
    %2038 = vmatprep.subr.mxu0 0.0
    %2039 = vmatpush1.xpose.msra.mxu0 0.0
    %2040 = vmatprep.subr.mxu0 0.0
    %2041 = vmatpush1.xpose.msra.mxu0 0.0
    %2042 = vmatprep.mubr.f32.mxu0 %v1152
    %2043 = vmatmul.mubr.f32.gmra.mrb[0].mxu0 %v1151
    %v2044 = vpop.f32.mrb[0].mxu0
    %v2045 = vadd.f32 %v1960, %v2044
    %v2046 = vpop.f32.mrb[0].mxu0
    %2047 = vmatprep.mubr.f32.mxu0 %v1160
    %2048 = vmatmul.mubr.f32.gmra.mrb[0].mxu0 %v1159
    %v2049 = vpop.f32.mrb[0].mxu0
    %v2050 = vadd.f32 %v1965, %v2049
    %v2051 = vpop.f32.mrb[0].mxu0
    %2052 = vmatprep.mubr.f32.mxu0 %v1168
    %2053 = vmatmul.mubr.f32.gmra.mrb[0].mxu0 %v1167
    %v2054 = vpop.f32.mrb[0].mxu0
    %v2055 = vadd.f32 %v1970, %v2054
    %v2056 = vpop.f32.mrb[0].mxu0
    %2057 = vmatprep.mubr.f32.mxu0 %v1176
    %2058 = vmatmul.mubr.f32.gmra.mrb[0].mxu0 %v1175
    %v2059 = vpop.f32.mrb[0].mxu0
    %v2060 = vadd.f32 %v1975, %v2059
    %v2061 = vpop.f32.mrb[0].mxu0
    %2062 = vdwg.mxu0
    %2063 = vmatprep.subr.mxu0 %v873
    %2064 = vmatpush1.xpose.msra.mxu0 %v871
    %2065 = vmatprep.subr.mxu0 0.0
    %2066 = vmatpush1.xpose.msra.mxu0 0.0
    %2067 = vmatprep.subr.mxu0 0.0
    %2068 = vmatpush1.xpose.msra.mxu0 0.0
    %2069 = vmatprep.subr.mxu0 0.0
    %2070 = vmatpush1.xpose.msra.mxu0 0.0
    %2071 = vmatprep.subr.mxu0 0.0
    %2072 = vmatpush1.xpose.msra.mxu0 0.0
    %2073 = vmatprep.subr.mxu0 0.0
    %2074 = vmatpush1.xpose.msra.mxu0 0.0
    %2075 = vmatprep.subr.mxu0 0.0
    %2076 = vmatpush1.xpose.msra.mxu0 0.0
    %2077 = vmatprep.subr.mxu0 0.0
    %2078 = vmatpush1.xpose.msra.mxu0 0.0
    %2079 = vmatprep.subr.mxu0 0.0
    %2080 = vmatpush1.xpose.msra.mxu0 0.0
    %2081 = vmatprep.subr.mxu0 0.0
    %2082 = vmatpush1.xpose.msra.mxu0 0.0
    %2083 = vmatprep.subr.mxu0 0.0
    %2084 = vmatpush1.xpose.msra.mxu0 0.0
    %2085 = vmatprep.subr.mxu0 0.0
    %2086 = vmatpush1.xpose.msra.mxu0 0.0
    %2087 = vmatprep.subr.mxu0 0.0
    %2088 = vmatpush1.xpose.msra.mxu0 0.0
    %2089 = vmatprep.subr.mxu0 0.0
    %2090 = vmatpush1.xpose.msra.mxu0 0.0
    %2091 = vmatprep.subr.mxu0 0.0
    %2092 = vmatpush1.xpose.msra.mxu0 0.0
    %2093 = vmatprep.subr.mxu0 0.0
    %2094 = vmatpush1.xpose.msra.mxu0 0.0
    %2095 = vmatprep.subr.mxu0 0.0
    %2096 = vmatpush1.xpose.msra.mxu0 0.0
    %2097 = vmatprep.subr.mxu0 0.0
    %2098 = vmatpush1.xpose.msra.mxu0 0.0
    %2099 = vmatprep.subr.mxu0 0.0
    %2100 = vmatpush1.xpose.msra.mxu0 0.0
    %2101 = vmatprep.subr.mxu0 0.0
    %2102 = vmatpush1.xpose.msra.mxu0 0.0
    %2103 = vmatprep.subr.mxu0 0.0
    %2104 = vmatpush1.xpose.msra.mxu0 0.0
    %2105 = vmatprep.subr.mxu0 0.0
    %2106 = vmatpush1.xpose.msra.mxu0 0.0
    %2107 = vmatprep.subr.mxu0 0.0
    %2108 = vmatpush1.xpose.msra.mxu0 0.0
    %2109 = vmatprep.subr.mxu0 0.0
    %2110 = vmatpush1.xpose.msra.mxu0 0.0
    %2111 = vmatprep.subr.mxu0 0.0
    %2112 = vmatpush1.xpose.msra.mxu0 0.0
    %2113 = vmatprep.subr.mxu0 0.0
    %2114 = vmatpush1.xpose.msra.mxu0 0.0
    %2115 = vmatprep.subr.mxu0 0.0
    %2116 = vmatpush1.xpose.msra.mxu0 0.0
    %2117 = vmatprep.subr.mxu0 0.0
    %2118 = vmatpush1.xpose.msra.mxu0 0.0
    %2119 = vmatprep.subr.mxu0 0.0
    %2120 = vmatpush1.xpose.msra.mxu0 0.0
    %2121 = vmatprep.subr.mxu0 0.0
    %2122 = vmatpush1.xpose.msra.mxu0 0.0
    %2123 = vmatprep.subr.mxu0 0.0
    %2124 = vmatpush1.xpose.msra.mxu0 0.0
    %2125 = vmatprep.subr.mxu0 0.0
    %2126 = vmatpush1.xpose.msra.mxu0 0.0
    %2127 = vmatprep.mubr.f32.mxu0 %v1154
    %2128 = vmatmul.mubr.f32.gmra.mrb[0].mxu0 %v1153
    %v2129 = vpop.f32.mrb[0].mxu0
    %v2130 = vadd.f32 %v2045, %v2129
    %v2131 = vpop.f32.mrb[0].mxu0
    %2132 = vmatprep.mubr.f32.mxu0 %v1162
    %2133 = vmatmul.mubr.f32.gmra.mrb[0].mxu0 %v1161
    %v2134 = vpop.f32.mrb[0].mxu0
    %v2135 = vadd.f32 %v2050, %v2134
    %v2136 = vpop.f32.mrb[0].mxu0
    %2137 = vmatprep.mubr.f32.mxu0 %v1170
    %2138 = vmatmul.mubr.f32.gmra.mrb[0].mxu0 %v1169
    %v2139 = vpop.f32.mrb[0].mxu0
    %v2140 = vadd.f32 %v2055, %v2139
    %v2141 = vpop.f32.mrb[0].mxu0
    %2142 = vmatprep.mubr.f32.mxu0 %v1178
    %2143 = vmatmul.mubr.f32.gmra.mrb[0].mxu0 %v1177
    %v2144 = vpop.f32.mrb[0].mxu0
    %v2145 = vadd.f32 %v2060, %v2144
    %v2146 = vpop.f32.mrb[0].mxu0
    %2147 = vdwg.mxu0
    %2148 = vmatprep.subr.mxu0 %v914
    %2149 = vmatpush1.xpose.msra.mxu0 %v912
    %2150 = vmatprep.subr.mxu0 0.0
    %2151 = vmatpush1.xpose.msra.mxu0 0.0
    %2152 = vmatprep.subr.mxu0 0.0
    %2153 = vmatpush1.xpose.msra.mxu0 0.0
    %2154 = vmatprep.subr.mxu0 0.0
    %2155 = vmatpush1.xpose.msra.mxu0 0.0
    %2156 = vmatprep.subr.mxu0 0.0
    %2157 = vmatpush1.xpose.msra.mxu0 0.0
    %2158 = vmatprep.subr.mxu0 0.0
    %2159 = vmatpush1.xpose.msra.mxu0 0.0
    %2160 = vmatprep.subr.mxu0 0.0
    %2161 = vmatpush1.xpose.msra.mxu0 0.0
    %2162 = vmatprep.subr.mxu0 0.0
    %2163 = vmatpush1.xpose.msra.mxu0 0.0
    %2164 = vmatprep.subr.mxu0 0.0
    %2165 = vmatpush1.xpose.msra.mxu0 0.0
    %2166 = vmatprep.subr.mxu0 0.0
    %2167 = vmatpush1.xpose.msra.mxu0 0.0
    %2168 = vmatprep.subr.mxu0 0.0
    %2169 = vmatpush1.xpose.msra.mxu0 0.0
    %2170 = vmatprep.subr.mxu0 0.0
    %2171 = vmatpush1.xpose.msra.mxu0 0.0
    %2172 = vmatprep.subr.mxu0 0.0
    %2173 = vmatpush1.xpose.msra.mxu0 0.0
    %2174 = vmatprep.subr.mxu0 0.0
    %2175 = vmatpush1.xpose.msra.mxu0 0.0
    %2176 = vmatprep.subr.mxu0 0.0
    %2177 = vmatpush1.xpose.msra.mxu0 0.0
    %2178 = vmatprep.subr.mxu0 0.0
    %2179 = vmatpush1.xpose.msra.mxu0 0.0
    %2180 = vmatprep.subr.mxu0 0.0
    %2181 = vmatpush1.xpose.msra.mxu0 0.0
    %2182 = vmatprep.subr.mxu0 0.0
    %2183 = vmatpush1.xpose.msra.mxu0 0.0
    %2184 = vmatprep.subr.mxu0 0.0
    %2185 = vmatpush1.xpose.msra.mxu0 0.0
    %2186 = vmatprep.subr.mxu0 0.0
    %2187 = vmatpush1.xpose.msra.mxu0 0.0
    %2188 = vmatprep.subr.mxu0 0.0
    %2189 = vmatpush1.xpose.msra.mxu0 0.0
    %2190 = vmatprep.subr.mxu0 0.0
    %2191 = vmatpush1.xpose.msra.mxu0 0.0
    %2192 = vmatprep.subr.mxu0 0.0
    %2193 = vmatpush1.xpose.msra.mxu0 0.0
    %2194 = vmatprep.subr.mxu0 0.0
    %2195 = vmatpush1.xpose.msra.mxu0 0.0
    %2196 = vmatprep.subr.mxu0 0.0
    %2197 = vmatpush1.xpose.msra.mxu0 0.0
    %2198 = vmatprep.subr.mxu0 0.0
    %2199 = vmatpush1.xpose.msra.mxu0 0.0
    %2200 = vmatprep.subr.mxu0 0.0
    %2201 = vmatpush1.xpose.msra.mxu0 0.0
    %2202 = vmatprep.subr.mxu0 0.0
    %2203 = vmatpush1.xpose.msra.mxu0 0.0
    %2204 = vmatprep.subr.mxu0 0.0
    %2205 = vmatpush1.xpose.msra.mxu0 0.0
    %2206 = vmatprep.subr.mxu0 0.0
    %2207 = vmatpush1.xpose.msra.mxu0 0.0
    %2208 = vmatprep.subr.mxu0 0.0
    %2209 = vmatpush1.xpose.msra.mxu0 0.0
    %2210 = vmatprep.subr.mxu0 0.0
    %2211 = vmatpush1.xpose.msra.mxu0 0.0
    %2212 = vmatprep.mubr.f32.mxu0 %v1156
    %2213 = vmatmul.mubr.f32.gmra.mrb[0].mxu0 %v1155
    %v2214 = vpop.f32.mrb[0].mxu0
    %v2215 = vadd.f32 %v2130, %v2214
    %v2216 = vpop.f32.mrb[0].mxu0
    %2217 = vmatprep.mubr.f32.mxu0 %v1164
    %2218 = vmatmul.mubr.f32.gmra.mrb[0].mxu0 %v1163
    %v2219 = vpop.f32.mrb[0].mxu0
    %v2220 = vadd.f32 %v2135, %v2219
    %v2221 = vpop.f32.mrb[0].mxu0
    %2222 = vmatprep.mubr.f32.mxu0 %v1172
    %2223 = vmatmul.mubr.f32.gmra.mrb[0].mxu0 %v1171
    %v2224 = vpop.f32.mrb[0].mxu0
    %v2225 = vadd.f32 %v2140, %v2224
    %v2226 = vpop.f32.mrb[0].mxu0
    %2227 = vmatprep.mubr.f32.mxu0 %v1180
    %2228 = vmatmul.mubr.f32.gmra.mrb[0].mxu0 %v1179
    %v2229 = vpop.f32.mrb[0].mxu0
    %v2230 = vadd.f32 %v2145, %v2229
    %v2231 = vpop.f32.mrb[0].mxu0
    %2232 = vdwg.mxu0
    %2233 = vmatprep.subr.mxu0 %v958
    %2234 = vmatpush1.xpose.msra.mxu0 %v956
    %2235 = vmatprep.subr.mxu0 0.0
    %2236 = vmatpush1.xpose.msra.mxu0 0.0
    %2237 = vmatprep.subr.mxu0 0.0
    %2238 = vmatpush1.xpose.msra.mxu0 0.0
    %2239 = vmatprep.subr.mxu0 0.0
    %2240 = vmatpush1.xpose.msra.mxu0 0.0
    %2241 = vmatprep.subr.mxu0 0.0
    %2242 = vmatpush1.xpose.msra.mxu0 0.0
    %2243 = vmatprep.subr.mxu0 0.0
    %2244 = vmatpush1.xpose.msra.mxu0 0.0
    %2245 = vmatprep.subr.mxu0 0.0
    %2246 = vmatpush1.xpose.msra.mxu0 0.0
    %2247 = vmatprep.subr.mxu0 0.0
    %2248 = vmatpush1.xpose.msra.mxu0 0.0
    %2249 = vmatprep.subr.mxu0 0.0
    %2250 = vmatpush1.xpose.msra.mxu0 0.0
    %2251 = vmatprep.subr.mxu0 0.0
    %2252 = vmatpush1.xpose.msra.mxu0 0.0
    %2253 = vmatprep.subr.mxu0 0.0
    %2254 = vmatpush1.xpose.msra.mxu0 0.0
    %2255 = vmatprep.subr.mxu0 0.0
    %2256 = vmatpush1.xpose.msra.mxu0 0.0
    %2257 = vmatprep.subr.mxu0 0.0
    %2258 = vmatpush1.xpose.msra.mxu0 0.0
    %2259 = vmatprep.subr.mxu0 0.0
    %2260 = vmatpush1.xpose.msra.mxu0 0.0
    %2261 = vmatprep.subr.mxu0 0.0
    %2262 = vmatpush1.xpose.msra.mxu0 0.0
    %2263 = vmatprep.subr.mxu0 0.0
    %2264 = vmatpush1.xpose.msra.mxu0 0.0
    %2265 = vmatprep.subr.mxu0 0.0
    %2266 = vmatpush1.xpose.msra.mxu0 0.0
    %2267 = vmatprep.subr.mxu0 0.0
    %2268 = vmatpush1.xpose.msra.mxu0 0.0
    %2269 = vmatprep.subr.mxu0 0.0
    %2270 = vmatpush1.xpose.msra.mxu0 0.0
    %2271 = vmatprep.subr.mxu0 0.0
    %2272 = vmatpush1.xpose.msra.mxu0 0.0
    %2273 = vmatprep.subr.mxu0 0.0
    %2274 = vmatpush1.xpose.msra.mxu0 0.0
    %2275 = vmatprep.subr.mxu0 0.0
    %2276 = vmatpush1.xpose.msra.mxu0 0.0
    %2277 = vmatprep.subr.mxu0 0.0
    %2278 = vmatpush1.xpose.msra.mxu0 0.0
    %2279 = vmatprep.subr.mxu0 0.0
    %2280 = vmatpush1.xpose.msra.mxu0 0.0
    %2281 = vmatprep.subr.mxu0 0.0
    %2282 = vmatpush1.xpose.msra.mxu0 0.0
    %2283 = vmatprep.subr.mxu0 0.0
    %2284 = vmatpush1.xpose.msra.mxu0 0.0
    %2285 = vmatprep.subr.mxu0 0.0
    %2286 = vmatpush1.xpose.msra.mxu0 0.0
    %2287 = vmatprep.subr.mxu0 0.0
    %2288 = vmatpush1.xpose.msra.mxu0 0.0
    %2289 = vmatprep.subr.mxu0 0.0
    %2290 = vmatpush1.xpose.msra.mxu0 0.0
    %2291 = vmatprep.subr.mxu0 0.0
    %2292 = vmatpush1.xpose.msra.mxu0 0.0
    %2293 = vmatprep.subr.mxu0 0.0
    %2294 = vmatpush1.xpose.msra.mxu0 0.0
    %2295 = vmatprep.subr.mxu0 0.0
    %2296 = vmatpush1.xpose.msra.mxu0 0.0
    %2297 = vmatprep.mubr.f32.mxu0 %v1182
    %2298 = vmatmul.mubr.f32.gmra.mrb[0].mxu0 %v1181
    %v2299 = vpop.f32.mrb[0].mxu0
    %v2300 = vadd.f32 0.0, %v2299
    %v2301 = vpop.f32.mrb[0].mxu0
    %2302 = vmatprep.mubr.f32.mxu0 %v1190
    %2303 = vmatmul.mubr.f32.gmra.mrb[0].mxu0 %v1189
    %v2304 = vpop.f32.mrb[0].mxu0
    %v2305 = vadd.f32 0.0, %v2304
    %v2306 = vpop.f32.mrb[0].mxu0
    %2307 = vmatprep.mubr.f32.mxu0 %v1198
    %2308 = vmatmul.mubr.f32.gmra.mrb[0].mxu0 %v1197
    %v2309 = vpop.f32.mrb[0].mxu0
    %v2310 = vadd.f32 0.0, %v2309
    %v2311 = vpop.f32.mrb[0].mxu0
    %2312 = vmatprep.mubr.f32.mxu0 %v1206
    %2313 = vmatmul.mubr.f32.gmra.mrb[0].mxu0 %v1205
    %v2314 = vpop.f32.mrb[0].mxu0
    %v2315 = vadd.f32 0.0, %v2314
    %v2316 = vpop.f32.mrb[0].mxu0
    %2317 = vdwg.mxu0
    %2318 = vmatprep.subr.mxu0 %v999
    %2319 = vmatpush1.xpose.msra.mxu0 %v997
    %2320 = vmatprep.subr.mxu0 0.0
    %2321 = vmatpush1.xpose.msra.mxu0 0.0
    %2322 = vmatprep.subr.mxu0 0.0
    %2323 = vmatpush1.xpose.msra.mxu0 0.0
    %2324 = vmatprep.subr.mxu0 0.0
    %2325 = vmatpush1.xpose.msra.mxu0 0.0
    %2326 = vmatprep.subr.mxu0 0.0
    %2327 = vmatpush1.xpose.msra.mxu0 0.0
    %2328 = vmatprep.subr.mxu0 0.0
    %2329 = vmatpush1.xpose.msra.mxu0 0.0
    %2330 = vmatprep.subr.mxu0 0.0
    %2331 = vmatpush1.xpose.msra.mxu0 0.0
    %2332 = vmatprep.subr.mxu0 0.0
    %2333 = vmatpush1.xpose.msra.mxu0 0.0
    %2334 = vmatprep.subr.mxu0 0.0
    %2335 = vmatpush1.xpose.msra.mxu0 0.0
    %2336 = vmatprep.subr.mxu0 0.0
    %2337 = vmatpush1.xpose.msra.mxu0 0.0
    %2338 = vmatprep.subr.mxu0 0.0
    %2339 = vmatpush1.xpose.msra.mxu0 0.0
    %2340 = vmatprep.subr.mxu0 0.0
    %2341 = vmatpush1.xpose.msra.mxu0 0.0
    %2342 = vmatprep.subr.mxu0 0.0
    %2343 = vmatpush1.xpose.msra.mxu0 0.0
    %2344 = vmatprep.subr.mxu0 0.0
    %2345 = vmatpush1.xpose.msra.mxu0 0.0
    %2346 = vmatprep.subr.mxu0 0.0
    %2347 = vmatpush1.xpose.msra.mxu0 0.0
    %2348 = vmatprep.subr.mxu0 0.0
    %2349 = vmatpush1.xpose.msra.mxu0 0.0
    %2350 = vmatprep.subr.mxu0 0.0
    %2351 = vmatpush1.xpose.msra.mxu0 0.0
    %2352 = vmatprep.subr.mxu0 0.0
    %2353 = vmatpush1.xpose.msra.mxu0 0.0
    %2354 = vmatprep.subr.mxu0 0.0
    %2355 = vmatpush1.xpose.msra.mxu0 0.0
    %2356 = vmatprep.subr.mxu0 0.0
    %2357 = vmatpush1.xpose.msra.mxu0 0.0
    %2358 = vmatprep.subr.mxu0 0.0
    %2359 = vmatpush1.xpose.msra.mxu0 0.0
    %2360 = vmatprep.subr.mxu0 0.0
    %2361 = vmatpush1.xpose.msra.mxu0 0.0
    %2362 = vmatprep.subr.mxu0 0.0
    %2363 = vmatpush1.xpose.msra.mxu0 0.0
    %2364 = vmatprep.subr.mxu0 0.0
    %2365 = vmatpush1.xpose.msra.mxu0 0.0
    %2366 = vmatprep.subr.mxu0 0.0
    %2367 = vmatpush1.xpose.msra.mxu0 0.0
    %2368 = vmatprep.subr.mxu0 0.0
    %2369 = vmatpush1.xpose.msra.mxu0 0.0
    %2370 = vmatprep.subr.mxu0 0.0
    %2371 = vmatpush1.xpose.msra.mxu0 0.0
    %2372 = vmatprep.subr.mxu0 0.0
    %2373 = vmatpush1.xpose.msra.mxu0 0.0
    %2374 = vmatprep.subr.mxu0 0.0
    %2375 = vmatpush1.xpose.msra.mxu0 0.0
    %2376 = vmatprep.subr.mxu0 0.0
    %2377 = vmatpush1.xpose.msra.mxu0 0.0
    %2378 = vmatprep.subr.mxu0 0.0
    %2379 = vmatpush1.xpose.msra.mxu0 0.0
    %2380 = vmatprep.subr.mxu0 0.0
    %2381 = vmatpush1.xpose.msra.mxu0 0.0
    %2382 = vmatprep.mubr.f32.mxu0 %v1184
    %2383 = vmatmul.mubr.f32.gmra.mrb[0].mxu0 %v1183
    %v2384 = vpop.f32.mrb[0].mxu0
    %v2385 = vadd.f32 %v2300, %v2384
    %v2386 = vpop.f32.mrb[0].mxu0
    %2387 = vmatprep.mubr.f32.mxu0 %v1192
    %2388 = vmatmul.mubr.f32.gmra.mrb[0].mxu0 %v1191
    %v2389 = vpop.f32.mrb[0].mxu0
    %v2390 = vadd.f32 %v2305, %v2389
    %v2391 = vpop.f32.mrb[0].mxu0
    %2392 = vmatprep.mubr.f32.mxu0 %v1200
    %2393 = vmatmul.mubr.f32.gmra.mrb[0].mxu0 %v1199
    %v2394 = vpop.f32.mrb[0].mxu0
    %v2395 = vadd.f32 %v2310, %v2394
    %v2396 = vpop.f32.mrb[0].mxu0
    %2397 = vmatprep.mubr.f32.mxu0 %v1208
    %2398 = vmatmul.mubr.f32.gmra.mrb[0].mxu0 %v1207
    %v2399 = vpop.f32.mrb[0].mxu0
    %v2400 = vadd.f32 %v2315, %v2399
    %v2401 = vpop.f32.mrb[0].mxu0
    %2402 = vdwg.mxu0
    %2403 = vmatprep.subr.mxu0 %v1040
    %2404 = vmatpush1.xpose.msra.mxu0 %v1038
    %2405 = vmatprep.subr.mxu0 0.0
    %2406 = vmatpush1.xpose.msra.mxu0 0.0
    %2407 = vmatprep.subr.mxu0 0.0
    %2408 = vmatpush1.xpose.msra.mxu0 0.0
    %2409 = vmatprep.subr.mxu0 0.0
    %2410 = vmatpush1.xpose.msra.mxu0 0.0
    %2411 = vmatprep.subr.mxu0 0.0
    %2412 = vmatpush1.xpose.msra.mxu0 0.0
    %2413 = vmatprep.subr.mxu0 0.0
    %2414 = vmatpush1.xpose.msra.mxu0 0.0
    %2415 = vmatprep.subr.mxu0 0.0
    %2416 = vmatpush1.xpose.msra.mxu0 0.0
    %2417 = vmatprep.subr.mxu0 0.0
    %2418 = vmatpush1.xpose.msra.mxu0 0.0
    %2419 = vmatprep.subr.mxu0 0.0
    %2420 = vmatpush1.xpose.msra.mxu0 0.0
    %2421 = vmatprep.subr.mxu0 0.0
    %2422 = vmatpush1.xpose.msra.mxu0 0.0
    %2423 = vmatprep.subr.mxu0 0.0
    %2424 = vmatpush1.xpose.msra.mxu0 0.0
    %2425 = vmatprep.subr.mxu0 0.0
    %2426 = vmatpush1.xpose.msra.mxu0 0.0
    %2427 = vmatprep.subr.mxu0 0.0
    %2428 = vmatpush1.xpose.msra.mxu0 0.0
    %2429 = vmatprep.subr.mxu0 0.0
    %2430 = vmatpush1.xpose.msra.mxu0 0.0
    %2431 = vmatprep.subr.mxu0 0.0
    %2432 = vmatpush1.xpose.msra.mxu0 0.0
    %2433 = vmatprep.subr.mxu0 0.0
    %2434 = vmatpush1.xpose.msra.mxu0 0.0
    %2435 = vmatprep.subr.mxu0 0.0
    %2436 = vmatpush1.xpose.msra.mxu0 0.0
    %2437 = vmatprep.subr.mxu0 0.0
    %2438 = vmatpush1.xpose.msra.mxu0 0.0
    %2439 = vmatprep.subr.mxu0 0.0
    %2440 = vmatpush1.xpose.msra.mxu0 0.0
    %2441 = vmatprep.subr.mxu0 0.0
    %2442 = vmatpush1.xpose.msra.mxu0 0.0
    %2443 = vmatprep.subr.mxu0 0.0
    %2444 = vmatpush1.xpose.msra.mxu0 0.0
    %2445 = vmatprep.subr.mxu0 0.0
    %2446 = vmatpush1.xpose.msra.mxu0 0.0
    %2447 = vmatprep.subr.mxu0 0.0
    %2448 = vmatpush1.xpose.msra.mxu0 0.0
    %2449 = vmatprep.subr.mxu0 0.0
    %2450 = vmatpush1.xpose.msra.mxu0 0.0
    %2451 = vmatprep.subr.mxu0 0.0
    %2452 = vmatpush1.xpose.msra.mxu0 0.0
    %2453 = vmatprep.subr.mxu0 0.0
    %2454 = vmatpush1.xpose.msra.mxu0 0.0
    %2455 = vmatprep.subr.mxu0 0.0
    %2456 = vmatpush1.xpose.msra.mxu0 0.0
    %2457 = vmatprep.subr.mxu0 0.0
    %2458 = vmatpush1.xpose.msra.mxu0 0.0
    %2459 = vmatprep.subr.mxu0 0.0
    %2460 = vmatpush1.xpose.msra.mxu0 0.0
    %2461 = vmatprep.subr.mxu0 0.0
    %2462 = vmatpush1.xpose.msra.mxu0 0.0
    %2463 = vmatprep.subr.mxu0 0.0
    %2464 = vmatpush1.xpose.msra.mxu0 0.0
    %2465 = vmatprep.subr.mxu0 0.0
    %2466 = vmatpush1.xpose.msra.mxu0 0.0
    %2467 = vmatprep.mubr.f32.mxu0 %v1186
    %2468 = vmatmul.mubr.f32.gmra.mrb[0].mxu0 %v1185
    %v2469 = vpop.f32.mrb[0].mxu0
    %v2470 = vadd.f32 %v2385, %v2469
    %v2471 = vpop.f32.mrb[0].mxu0
    %2472 = vmatprep.mubr.f32.mxu0 %v1194
    %2473 = vmatmul.mubr.f32.gmra.mrb[0].mxu0 %v1193
    %v2474 = vpop.f32.mrb[0].mxu0
    %v2475 = vadd.f32 %v2390, %v2474
    %v2476 = vpop.f32.mrb[0].mxu0
    %2477 = vmatprep.mubr.f32.mxu0 %v1202
    %2478 = vmatmul.mubr.f32.gmra.mrb[0].mxu0 %v1201
    %v2479 = vpop.f32.mrb[0].mxu0
    %v2480 = vadd.f32 %v2395, %v2479
    %v2481 = vpop.f32.mrb[0].mxu0
    %2482 = vmatprep.mubr.f32.mxu0 %v1210
    %2483 = vmatmul.mubr.f32.gmra.mrb[0].mxu0 %v1209
    %v2484 = vpop.f32.mrb[0].mxu0
    %v2485 = vadd.f32 %v2400, %v2484
    %v2486 = vpop.f32.mrb[0].mxu0
    %2487 = vdwg.mxu0
    %2488 = vmatprep.subr.mxu0 %v1081
    %2489 = vmatpush1.xpose.msra.mxu0 %v1079
    %2490 = vmatprep.subr.mxu0 0.0
    %2491 = vmatpush1.xpose.msra.mxu0 0.0
    %2492 = vmatprep.subr.mxu0 0.0
    %2493 = vmatpush1.xpose.msra.mxu0 0.0
    %2494 = vmatprep.subr.mxu0 0.0
    %2495 = vmatpush1.xpose.msra.mxu0 0.0
    %2496 = vmatprep.subr.mxu0 0.0
    %2497 = vmatpush1.xpose.msra.mxu0 0.0
    %2498 = vmatprep.subr.mxu0 0.0
    %2499 = vmatpush1.xpose.msra.mxu0 0.0
    %2500 = vmatprep.subr.mxu0 0.0
    %2501 = vmatpush1.xpose.msra.mxu0 0.0
    %2502 = vmatprep.subr.mxu0 0.0
    %2503 = vmatpush1.xpose.msra.mxu0 0.0
    %2504 = vmatprep.subr.mxu0 0.0
    %2505 = vmatpush1.xpose.msra.mxu0 0.0
    %2506 = vmatprep.subr.mxu0 0.0
    %2507 = vmatpush1.xpose.msra.mxu0 0.0
    %2508 = vmatprep.subr.mxu0 0.0
    %2509 = vmatpush1.xpose.msra.mxu0 0.0
    %2510 = vmatprep.subr.mxu0 0.0
    %2511 = vmatpush1.xpose.msra.mxu0 0.0
    %2512 = vmatprep.subr.mxu0 0.0
    %2513 = vmatpush1.xpose.msra.mxu0 0.0
    %2514 = vmatprep.subr.mxu0 0.0
    %2515 = vmatpush1.xpose.msra.mxu0 0.0
    %2516 = vmatprep.subr.mxu0 0.0
    %2517 = vmatpush1.xpose.msra.mxu0 0.0
    %2518 = vmatprep.subr.mxu0 0.0
    %2519 = vmatpush1.xpose.msra.mxu0 0.0
    %2520 = vmatprep.subr.mxu0 0.0
    %2521 = vmatpush1.xpose.msra.mxu0 0.0
    %2522 = vmatprep.subr.mxu0 0.0
    %2523 = vmatpush1.xpose.msra.mxu0 0.0
    %2524 = vmatprep.subr.mxu0 0.0
    %2525 = vmatpush1.xpose.msra.mxu0 0.0
    %2526 = vmatprep.subr.mxu0 0.0
    %2527 = vmatpush1.xpose.msra.mxu0 0.0
    %2528 = vmatprep.subr.mxu0 0.0
    %2529 = vmatpush1.xpose.msra.mxu0 0.0
    %2530 = vmatprep.subr.mxu0 0.0
    %2531 = vmatpush1.xpose.msra.mxu0 0.0
    %2532 = vmatprep.subr.mxu0 0.0
    %2533 = vmatpush1.xpose.msra.mxu0 0.0
    %2534 = vmatprep.subr.mxu0 0.0
    %2535 = vmatpush1.xpose.msra.mxu0 0.0
    %2536 = vmatprep.subr.mxu0 0.0
    %2537 = vmatpush1.xpose.msra.mxu0 0.0
    %2538 = vmatprep.subr.mxu0 0.0
    %2539 = vmatpush1.xpose.msra.mxu0 0.0
    %2540 = vmatprep.subr.mxu0 0.0
    %2541 = vmatpush1.xpose.msra.mxu0 0.0
    %2542 = vmatprep.subr.mxu0 0.0
    %2543 = vmatpush1.xpose.msra.mxu0 0.0
    %2544 = vmatprep.subr.mxu0 0.0
    %2545 = vmatpush1.xpose.msra.mxu0 0.0
    %2546 = vmatprep.subr.mxu0 0.0
    %2547 = vmatpush1.xpose.msra.mxu0 0.0
    %2548 = vmatprep.subr.mxu0 0.0
    %2549 = vmatpush1.xpose.msra.mxu0 0.0
    %2550 = vmatprep.subr.mxu0 0.0
    %2551 = vmatpush1.xpose.msra.mxu0 0.0
    %2552 = vmatprep.mubr.f32.mxu0 %v1188
    %2553 = vmatmul.mubr.f32.gmra.mrb[0].mxu0 %v1187
    %v2554 = vpop.f32.mrb[0].mxu0
    %v2555 = vadd.f32 %v2470, %v2554
    %v2556 = vpop.f32.mrb[0].mxu0
    %2557 = vmatprep.mubr.f32.mxu0 %v1196
    %2558 = vmatmul.mubr.f32.gmra.mrb[0].mxu0 %v1195
    %v2559 = vpop.f32.mrb[0].mxu0
    %v2560 = vadd.f32 %v2475, %v2559
    %v2561 = vpop.f32.mrb[0].mxu0
    %2562 = vmatprep.mubr.f32.mxu0 %v1204
    %2563 = vmatmul.mubr.f32.gmra.mrb[0].mxu0 %v1203
    %v2564 = vpop.f32.mrb[0].mxu0
    %v2565 = vadd.f32 %v2480, %v2564
    %v2566 = vpop.f32.mrb[0].mxu0
    %2567 = vmatprep.mubr.f32.mxu0 %v1212
    %2568 = vmatmul.mubr.f32.gmra.mrb[0].mxu0 %v1211
    %v2569 = vpop.f32.mrb[0].mxu0
    %v2570 = vadd.f32 %v2485, %v2569
    %v2571 = vpop.f32.mrb[0].mxu0
    %2572 = vdwg.mxu0
    %2573 = vxpose.xlu0.b32.start [1/16] %v1535, 128
    %2574 = vxpose.xlu0.b32.cont [2/16] %v1540, 128
    %2575 = vxpose.xlu0.b32.cont [3/16] %v1545, 128
    %2576 = vxpose.xlu0.b32.cont [4/16] %v1550, 128
    %2577 = vxpose.xlu0.b32.cont [5/16] 0.0, 128
    %2578 = vxpose.xlu0.b32.cont [6/16] 0.0, 128
    %2579 = vxpose.xlu0.b32.cont [7/16] 0.0, 128
    %2580 = vxpose.xlu0.b32.cont [8/16] 0.0, 128
    %2581 = vxpose.xlu0.b32.cont [9/16] 0.0, 128
    %2582 = vxpose.xlu0.b32.cont [10/16] 0.0, 128
    %2583 = vxpose.xlu0.b32.cont [11/16] 0.0, 128
    %2584 = vxpose.xlu0.b32.cont [12/16] 0.0, 128
    %2585 = vxpose.xlu0.b32.cont [13/16] 0.0, 128
    %2586 = vxpose.xlu0.b32.cont [14/16] 0.0, 128
    %2587 = vxpose.xlu0.b32.cont [15/16] 0.0, 128
    %2588 = vxpose.xlu0.b32.end [16/16] 0.0, 128
    %v2589 = vpop.trf.xlu0
    %v2590 = vpop.trf.xlu0
    %v2591 = vpop.trf.xlu0
    %v2592 = vpop.trf.xlu0
    %v2593 = vpop.trf.xlu0
    %v2594 = vpop.trf.xlu0
    %v2595 = vpop.trf.xlu0
    %v2596 = vpop.trf.xlu0
    %v2597 = vpop.trf.xlu0
    %v2598 = vpop.trf.xlu0
    %v2599 = vpop.trf.xlu0
    %v2600 = vpop.trf.xlu0
    %v2601 = vpop.trf.xlu0
    %v2602 = vpop.trf.xlu0
    %v2603 = vpop.trf.xlu0
    %v2604 = vpop.trf.xlu0
    %2605 = vxpose.xlu0.b32.start [1/16] %v1875, 128
    %2606 = vxpose.xlu0.b32.cont [2/16] %v1880, 128
    %2607 = vxpose.xlu0.b32.cont [3/16] %v1885, 128
    %2608 = vxpose.xlu0.b32.cont [4/16] %v1890, 128
    %2609 = vxpose.xlu0.b32.cont [5/16] 0.0, 128
    %2610 = vxpose.xlu0.b32.cont [6/16] 0.0, 128
    %2611 = vxpose.xlu0.b32.cont [7/16] 0.0, 128
    %2612 = vxpose.xlu0.b32.cont [8/16] 0.0, 128
    %2613 = vxpose.xlu0.b32.cont [9/16] 0.0, 128
    %2614 = vxpose.xlu0.b32.cont [10/16] 0.0, 128
    %2615 = vxpose.xlu0.b32.cont [11/16] 0.0, 128
    %2616 = vxpose.xlu0.b32.cont [12/16] 0.0, 128
    %2617 = vxpose.xlu0.b32.cont [13/16] 0.0, 128
    %2618 = vxpose.xlu0.b32.cont [14/16] 0.0, 128
    %2619 = vxpose.xlu0.b32.cont [15/16] 0.0, 128
    %2620 = vxpose.xlu0.b32.end [16/16] 0.0, 128
    %v2621 = vpop.trf.xlu0
    %v2622 = vpop.trf.xlu0
    %v2623 = vpop.trf.xlu0
    %v2624 = vpop.trf.xlu0
    %v2625 = vpop.trf.xlu0
    %v2626 = vpop.trf.xlu0
    %v2627 = vpop.trf.xlu0
    %v2628 = vpop.trf.xlu0
    %v2629 = vpop.trf.xlu0
    %v2630 = vpop.trf.xlu0
    %v2631 = vpop.trf.xlu0
    %v2632 = vpop.trf.xlu0
    %v2633 = vpop.trf.xlu0
    %v2634 = vpop.trf.xlu0
    %v2635 = vpop.trf.xlu0
    %v2636 = vpop.trf.xlu0
    %2637 = vxpose.xlu0.b32.start [1/16] %v2215, 128
    %2638 = vxpose.xlu0.b32.cont [2/16] %v2220, 128
    %2639 = vxpose.xlu0.b32.cont [3/16] %v2225, 128
    %2640 = vxpose.xlu0.b32.cont [4/16] %v2230, 128
    %2641 = vxpose.xlu0.b32.cont [5/16] 0.0, 128
    %2642 = vxpose.xlu0.b32.cont [6/16] 0.0, 128
    %2643 = vxpose.xlu0.b32.cont [7/16] 0.0, 128
    %2644 = vxpose.xlu0.b32.cont [8/16] 0.0, 128
    %2645 = vxpose.xlu0.b32.cont [9/16] 0.0, 128
    %2646 = vxpose.xlu0.b32.cont [10/16] 0.0, 128
    %2647 = vxpose.xlu0.b32.cont [11/16] 0.0, 128
    %2648 = vxpose.xlu0.b32.cont [12/16] 0.0, 128
    %2649 = vxpose.xlu0.b32.cont [13/16] 0.0, 128
    %2650 = vxpose.xlu0.b32.cont [14/16] 0.0, 128
    %2651 = vxpose.xlu0.b32.cont [15/16] 0.0, 128
    %2652 = vxpose.xlu0.b32.end [16/16] 0.0, 128
    %v2653 = vpop.trf.xlu0
    %v2654 = vpop.trf.xlu0
    %v2655 = vpop.trf.xlu0
    %v2656 = vpop.trf.xlu0
    %v2657 = vpop.trf.xlu0
    %v2658 = vpop.trf.xlu0
    %v2659 = vpop.trf.xlu0
    %v2660 = vpop.trf.xlu0
    %v2661 = vpop.trf.xlu0
    %v2662 = vpop.trf.xlu0
    %v2663 = vpop.trf.xlu0
    %v2664 = vpop.trf.xlu0
    %v2665 = vpop.trf.xlu0
    %v2666 = vpop.trf.xlu0
    %v2667 = vpop.trf.xlu0
    %v2668 = vpop.trf.xlu0
    %2669 = vxpose.xlu0.b32.start [1/16] %v2555, 128
    %2670 = vxpose.xlu0.b32.cont [2/16] %v2560, 128
    %2671 = vxpose.xlu0.b32.cont [3/16] %v2565, 128
    %2672 = vxpose.xlu0.b32.cont [4/16] %v2570, 128
    %2673 = vxpose.xlu0.b32.cont [5/16] 0.0, 128
    %2674 = vxpose.xlu0.b32.cont [6/16] 0.0, 128
    %2675 = vxpose.xlu0.b32.cont [7/16] 0.0, 128
    %2676 = vxpose.xlu0.b32.cont [8/16] 0.0, 128
    %2677 = vxpose.xlu0.b32.cont [9/16] 0.0, 128
    %2678 = vxpose.xlu0.b32.cont [10/16] 0.0, 128
    %2679 = vxpose.xlu0.b32.cont [11/16] 0.0, 128
    %2680 = vxpose.xlu0.b32.cont [12/16] 0.0, 128
    %2681 = vxpose.xlu0.b32.cont [13/16] 0.0, 128
    %2682 = vxpose.xlu0.b32.cont [14/16] 0.0, 128
    %2683 = vxpose.xlu0.b32.cont [15/16] 0.0, 128
    %2684 = vxpose.xlu0.b32.end [16/16] 0.0, 128
    %v2685 = vpop.trf.xlu0
    %v2686 = vpop.trf.xlu0
    %v2687 = vpop.trf.xlu0
    %v2688 = vpop.trf.xlu0
    %v2689 = vpop.trf.xlu0
    %v2690 = vpop.trf.xlu0
    %v2691 = vpop.trf.xlu0
    %v2692 = vpop.trf.xlu0
    %v2693 = vpop.trf.xlu0
    %v2694 = vpop.trf.xlu0
    %v2695 = vpop.trf.xlu0
    %v2696 = vpop.trf.xlu0
    %v2697 = vpop.trf.xlu0
    %v2698 = vpop.trf.xlu0
    %v2699 = vpop.trf.xlu0
    %v2700 = vpop.trf.xlu0
    %v2701 = vcombine.low %v2589, %v2653
    %v2703 = vunpack.c.l.s4 1983009808
    %v2704 = vunpack.c.0.s8 %v2703
    %v2705 = vlaneseq
    %v2706 = vshrl.u32 %v2705, 7
    %v2707 = vsub.s32 %v2704, %v2706
    %v2708 = vrot.slane %v2701, %v2707
    %v2709 = vcombine.low %v2621, %v2685
    %v2711 = vunpack.c.l.s4 1983009808
    %v2712 = vunpack.c.0.s8 %v2711
    %v2713 = vlaneseq
    %v2714 = vshrl.u32 %v2713, 7
    %v2715 = vsub.s32 %v2712, %v2714
    %v2716 = vrot.slane %v2709, %v2715
    %v2717 = vcombine.low %v2708, %v2716
    %v2718 = vcombine.high %v2708, %v2716
    %v2720 = vunpack.c.l.s4 1934713408
    %v2721 = vunpack.c.0.s8 %v2720
    %v2722 = vlaneseq
    %v2723 = vshrl.u32 %v2722, 7
    %v2724 = vsub.s32 %v2721, %v2723
    %v2725 = vrot.slane %v2717, %v2724
    %v2727 = vunpack.c.l.s4 1934713408
    %v2728 = vunpack.c.0.s8 %v2727
    %v2729 = vlaneseq
    %v2730 = vshrl.u32 %v2729, 7
    %v2731 = vsub.s32 %v2728, %v2730
    %v2732 = vrot.slane %v2718, %v2731
    %v2733 = vcombine.high %v2725, 0.0
    %v2734 = vcombine.high %v2732, 0.0
    %v2735 = vcombine.low %v2725, %v2732
    %v2737 = vunpack.c.l.s4 1983009808
    %v2738 = vunpack.c.0.s8 %v2737
    %v2739 = vlaneseq
    %v2740 = vshrl.u32 %v2739, 7
    %v2741 = vsub.s32 %v2738, %v2740
    %v2742 = vrot.slane %v2735, %v2741
    %v2743 = vcombine.low %v2733, %v2734
    %v2745 = vunpack.c.l.s4 1983009808
    %v2746 = vunpack.c.0.s8 %v2745
    %v2747 = vlaneseq
    %v2748 = vshrl.u32 %v2747, 7
    %v2749 = vsub.s32 %v2746, %v2748
    %v2750 = vrot.slane %v2743, %v2749
    %v2751 = vcombine.low %v2742, %v2750
    %v2752 = vcombine.high %v2742, %v2750
    %v2754 = vunpack.c.l.s4 1934713408
    %v2755 = vunpack.c.0.s8 %v2754
    %v2756 = vlaneseq
    %v2757 = vshrl.u32 %v2756, 7
    %v2758 = vsub.s32 %v2755, %v2757
    %v2759 = vrot.slane %v2751, %v2758
    %v2761 = vunpack.c.l.s4 1934713408
    %v2762 = vunpack.c.0.s8 %v2761
    %v2763 = vlaneseq
    %v2764 = vshrl.u32 %v2763, 7
    %v2765 = vsub.s32 %v2762, %v2764
    %v2766 = vrot.slane %v2752, %v2765
    %v2767 = vcombine.high %v2759, 0.0
    %v2768 = vcombine.high %v2766, 0.0
    %2770 = vrot.lane.b32.xlu0 %v2767, 32
    %v2771 = vpop.permute.xlu0 %2770
    %2774 = vrot.lane.b32.xlu0 %v2766, 64
    %v2775 = vpop.permute.xlu0 %2774
    %2778 = vrot.lane.b32.xlu0 %v2768, 96
    %v2779 = vpop.permute.xlu0 %2778
    %vm2781 = vcmask 261120
    %v2782 = vsel %vm2781, %v2759, %v2771
    %vm2783 = vcmask 523264
    %v2784 = vsel %vm2783, %v2782, %v2775
    %vm2785 = vcmask 785408
    %v2786 = vsel %vm2785, %v2784, %v2779
    %2787 = vst [vmem:[#allocation8] sm:$0xf] %v2786
    // Predicated region
    $region30: #{tpu_custom_call.1} parent=1 // pred_check
      _
    $region31: #{tpu_custom_call.1} parent=1 // pred_check_branch
      %2789 = sbr.rel (0) target = $region33
    $region32: #{tpu_custom_call.1} parent=1 // pred_region
      %s2791 = ssub.s32 64, 64
      %2792 = vsyncadd [#allocation4], %s2791
      %s2794 = sshll.u32 [#allocation8], 4
      %s2795 = int_to_ptr.vmem [resolvable:$true] %s2794
      %2797 = dma.vmem_to_hbm [thread:$0]  %s2795, 64, %s4, [#allocation4]
    $region33: #{tpu_custom_call.1} parent=1 // pred_fallthru
      _
    // Predicated region
    $region34: #{tpu_custom_call.1} parent=1 // pred_check
      _
    $region35: #{tpu_custom_call.1} parent=1 // pred_check_branch
      %2799 = sbr.rel (0) target = $region37
    $region36: #{tpu_custom_call.1} parent=1 // pred_region
      %2800 = dma.done [#allocation4], 64
    $region37: #{tpu_custom_call.1} parent=1 // pred_fallthru
      _
    %2801 = vsyncpa [#allocation3], 1
    %2802 = vsyncpa [#allocation6], 1
    %2803 = vsyncpa [#allocation4], 1

</llo_original>
